<compile_context>
chip_gen: v7x
topology: tpu7x:2x2x1
jax: 0.10.0
libtpu: 0.0.40
codegen_flags: <defaults>
</compile_context>

<pallas_src>
import jax
import jax.numpy as jnp
from jax.experimental import pallas as pl
from jax.experimental.pallas import tpu as pltpu


def mixnet_kernel(x_ref, feat_ref, w_ih_ref, w_hh_ref, b_ref,
                  w_out_h_ref, w_out_f_ref, b_out_ref, out_ref):
    # x_ref:      [S, E]       sentence embeddings
    # feat_ref:   [1, F]       tweet features
    # w_ih_ref:   [E, 4*Hp]    LSTM input->gates, transposed, gate-padded (i,f,g,o)
    # w_hh_ref:   [Hp, 4*Hp]   LSTM hidden->gates, transposed, row+gate padded
    # b_ref:      [1, 4*Hp]    combined LSTM bias (b_ih + b_hh), gate-padded
    # w_out_h_ref:[Hp, T]      linear weight slice for the hidden state, row-padded
    # w_out_f_ref:[F, T]       linear weight slice for the features
    # b_out_ref:  [1, T]       linear bias
    # out_ref:    [1, T]       log-softmax scores
    S = x_ref.shape[0]
    Hp = w_hh_ref.shape[0]          # padded hidden size (multiple of 128)

    w_hh = w_hh_ref[...]            # keep resident across the unrolled loop

    # Hoisted input projection + bias: computed once for all timesteps.
    xg = (jnp.dot(x_ref[...], w_ih_ref[...], preferred_element_type=jnp.float32)
          + b_ref[...])             # [S, 4*Hp]

    def gates_to_state(gates, c):
        # Each gate sits in its own 128-lane-aligned tile -> slices are free and
        # every activation is one full-vreg EUP push.
        i = jax.nn.sigmoid(gates[:, 0 * Hp:1 * Hp])
        f = jax.nn.sigmoid(gates[:, 1 * Hp:2 * Hp])
        g = jnp.tanh(gates[:, 2 * Hp:3 * Hp])
        o = jax.nn.sigmoid(gates[:, 3 * Hp:4 * Hp])
        c_new = f * c + i * g
        h_new = o * jnp.tanh(c_new)
        return h_new, c_new

    # t = 0 peeled: h0 = c0 = 0, so h@W_hh and the f*c term vanish.
    g0 = xg[0:1, :]
    i0 = jax.nn.sigmoid(g0[:, 0 * Hp:1 * Hp])
    gg0 = jnp.tanh(g0[:, 2 * Hp:3 * Hp])
    o0 = jax.nn.sigmoid(g0[:, 3 * Hp:4 * Hp])
    c = i0 * gg0                    # [1, Hp] (padding lanes stay 0)
    h = o0 * jnp.tanh(c)            # [1, Hp] (padding lanes stay 0)

    # Remaining steps, fully unrolled (S is a compile-time constant): only the
    # h@W_hh matmul and the elementwise gate math sit on the serial chain.
    for t in range(1, S):
        gates = xg[t:t + 1, :] + jnp.dot(h, w_hh,
                                         preferred_element_type=jnp.float32)
        h, c = gates_to_state(gates, c)

    # Linear on [h_last | features] as two matmuls (equivalent to the concat).
    logits = (jnp.dot(h, w_out_h_ref[...], preferred_element_type=jnp.float32)
              + jnp.dot(feat_ref[...], w_out_f_ref[...],
                        preferred_element_type=jnp.float32)
              + b_out_ref[...])     # [1, T]

    m = jnp.max(logits, axis=-1, keepdims=True)
    lse = jnp.log(jnp.sum(jnp.exp(logits - m), axis=-1, keepdims=True)) + m
    out_ref[...] = logits - lse


def mixnet_forward(sentence, features_tweet, params):
    S, E = sentence.shape
    feat = features_tweet.reshape(1, -1).astype(jnp.float32)
    F_ = feat.shape[1]
    Hp = params["w_hh_t"].shape[0]
    T = params["b_out"].shape[1]

    full = lambda shape: pl.BlockSpec(shape, lambda i: (0,) * len(shape))

    return pl.pallas_call(
        mixnet_kernel,
        out_shape=jax.ShapeDtypeStruct((1, T), jnp.float32),
        grid=(1,),
        in_specs=[
            full((S, E)),
            full((1, F_)),
            full((E, 4 * Hp)),
            full((Hp, 4 * Hp)),
            full((1, 4 * Hp)),
            full((Hp, T)),
            full((F_, T)),
            full((1, T)),
        ],
        out_specs=pl.BlockSpec((1, T), lambda i: (0, 0)),
        compiler_params=pltpu.CompilerParams(
            dimension_semantics=("arbitrary",)),
    )(sentence.astype(jnp.float32), feat,
      params["w_ih_t"], params["w_hh_t"], params["b_lstm"],
      params["w_out_h_t"], params["w_out_f_t"], params["b_out"])


def mixnet_reference(sentence, features_tweet, params):
    """Pure-JAX reference using the UNPADDED weights (verifies padded kernel)."""
    S, E = sentence.shape
    H = params["raw_w_hh_t"].shape[0]
    h = jnp.zeros((1, H), jnp.float32)
    c = jnp.zeros((1, H), jnp.float32)
    for t in range(S):
        x_t = sentence[t:t + 1]
        g = (x_t @ params["raw_w_ih_t"] + h @ params["raw_w_hh_t"]
             + params["raw_b_lstm"])
        i = jax.nn.sigmoid(g[:, 0 * H:1 * H])
        f = jax.nn.sigmoid(g[:, 1 * H:2 * H])
        gg = jnp.tanh(g[:, 2 * H:3 * H])
        o = jax.nn.sigmoid(g[:, 3 * H:4 * H])
        c = f * c + i * gg
        h = o * jnp.tanh(c)
    feat = features_tweet.reshape(1, -1)
    logits = (h @ params["raw_w_out_h_t"] + feat @ params["raw_w_out_f_t"]
              + params["b_out"])
    return jax.nn.log_softmax(logits, axis=-1)


def init_params(key, embedding_dim, hidden_dim, target_size, features_size):
    """Deterministic init mirroring the module: xavier_normal on 2-D weights,
    zeros on 1-D biases (xavier raises ValueError for 1-D -> constant 0).
    Produces both the raw weights (reference) and lane-padded weights (kernel):
    each LSTM gate is padded to its own 128-lane tile, hidden dim padded to Hp."""
    H = hidden_dim
    Hp = ((H + 127) // 128) * 128

    def xavier(k, shape):
        fan_out, fan_in = shape
        std = (2.0 / (fan_in + fan_out)) ** 0.5
        return std * jax.random.normal(k, shape, dtype=jnp.float32)

    k1, k2, k3 = jax.random.split(key, 3)
    w_ih = xavier(k1, (4 * H, embedding_dim))                    # PyTorch weight_ih_l0
    w_hh = xavier(k2, (4 * H, H))                                # PyTorch weight_hh_l0
    w_out = xavier(k3, (target_size, H + features_size))         # Linear weight
    b_lstm = jnp.zeros((1, 4 * H), jnp.float32)                  # b_ih + b_hh (zeros)
    b_out = jnp.zeros((1, target_size), jnp.float32)

    w_ih_t = w_ih.T                                              # [E, 4H]
    w_hh_t = w_hh.T                                              # [H, 4H]
    w_out_h_t = w_out[:, :H].T                                   # [H, T]
    w_out_f_t = w_out[:, H:].T                                   # [F, T]

    def pad_gate_cols(w_t):
        # [K, 4H] -> [K, 4Hp]: gate k goes to columns [k*Hp : k*Hp+H], rest zero.
        K = w_t.shape[0]
        out = jnp.zeros((K, 4 * Hp), jnp.float32)
        for k in range(4):
            out = out.at[:, k * Hp:k * Hp + H].set(w_t[:, k * H:(k + 1) * H])
        return out

    w_ih_pad = pad_gate_cols(w_ih_t)                             # [E, 4Hp]
    w_hh_pad = jnp.zeros((Hp, 4 * Hp), jnp.float32).at[:H, :].set(
        pad_gate_cols(w_hh_t))                                   # [Hp, 4Hp]
    b_pad = pad_gate_cols(b_lstm)                                # [1, 4Hp]
    w_out_h_pad = jnp.zeros((Hp, target_size), jnp.float32).at[:H, :].set(
        w_out_h_t)                                               # [Hp, T]

    return {
        # kernel (padded) parameters
        "w_ih_t": w_ih_pad,
        "w_hh_t": w_hh_pad,
        "b_lstm": b_pad,
        "w_out_h_t": w_out_h_pad,
        "w_out_f_t": w_out_f_t,
        "b_out": b_out,
        # raw parameters for the reference
        "raw_w_ih_t": w_ih_t,
        "raw_w_hh_t": w_hh_t,
        "raw_b_lstm": b_lstm,
        "raw_w_out_h_t": w_out_h_t,
        "raw_w_out_f_t": w_out_f_t,
    }


if __name__ == "__main__":
    # Small shapes consistent with the module (batch_size=1, num_layers=1, directions=1).
    SEQ, EMB, HID, FEAT, TGT = 8, 16, 32, 16, 8

    key = jax.random.PRNGKey(0)
    k_sent, k_feat, k_param = jax.random.split(key, 3)

    sentence = jax.random.normal(k_sent, (SEQ, EMB), dtype=jnp.float32)
    features_tweet = jax.random.normal(k_feat, (FEAT,), dtype=jnp.float32)
    params = init_params(k_param, EMB, HID, TGT, FEAT)

    out = mixnet_forward(sentence, features_tweet, params)
    out = jax.block_until_ready(out)

    ref = mixnet_reference(sentence, features_tweet, params)
    assert out.shape == (1, TGT)
    assert jnp.allclose(out, ref, atol=1e-4, rtol=1e-4), (out, ref)

    print("KERNEL_OK")
</pallas_src>

<mosaic_0001>
module attributes {stable_mosaic.version = 11 : i64} {
  func.func @mixnet_kernel(%arg0: i32, %arg1: memref<8x16xf32, #tpu.memory_space<vmem>>, %arg2: memref<1x16xf32, #tpu.memory_space<vmem>>, %arg3: memref<16x512xf32, #tpu.memory_space<vmem>>, %arg4: memref<128x512xf32, #tpu.memory_space<vmem>>, %arg5: memref<1x512xf32, #tpu.memory_space<vmem>>, %arg6: memref<128x8xf32, #tpu.memory_space<vmem>>, %arg7: memref<16x8xf32, #tpu.memory_space<vmem>>, %arg8: memref<1x8xf32, #tpu.memory_space<vmem>>, %arg9: memref<1x8xf32, #tpu.memory_space<vmem>>) attributes {dimension_semantics = [#tpu.dimension_semantics<arbitrary>], iteration_bounds = array<i64: 1>, scalar_prefetch = 0 : i64, scratch_operands = 0 : i64, tpu.core_type = #tpu.core_type<tc>, window_params = [{pipeline_mode = #tpu.pipeline_mode<synchronous>, transform_indices = @transform_0, window_bounds = array<i64: 8, 16>}, {pipeline_mode = #tpu.pipeline_mode<synchronous>, transform_indices = @transform_1, window_bounds = array<i64: 1, 16>}, {pipeline_mode = #tpu.pipeline_mode<synchronous>, transform_indices = @transform_2, window_bounds = array<i64: 16, 512>}, {pipeline_mode = #tpu.pipeline_mode<synchronous>, transform_indices = @transform_3, window_bounds = array<i64: 128, 512>}, {pipeline_mode = #tpu.pipeline_mode<synchronous>, transform_indices = @transform_4, window_bounds = array<i64: 1, 512>}, {pipeline_mode = #tpu.pipeline_mode<synchronous>, transform_indices = @transform_5, window_bounds = array<i64: 128, 8>}, {pipeline_mode = #tpu.pipeline_mode<synchronous>, transform_indices = @transform_6, window_bounds = array<i64: 16, 8>}, {pipeline_mode = #tpu.pipeline_mode<synchronous>, transform_indices = @transform_7, window_bounds = array<i64: 1, 8>}, {pipeline_mode = #tpu.pipeline_mode<synchronous>, transform_indices = @transform_8, window_bounds = array<i64: 1, 8>}]} {
    %c0 = arith.constant 0 : index
    %c0_0 = arith.constant 0 : index
    %0 = vector.load %arg4[%c0, %c0_0] : memref<128x512xf32, #tpu.memory_space<vmem>>, vector<128x512xf32>
    %c0_1 = arith.constant 0 : index
    %c0_2 = arith.constant 0 : index
    %1 = vector.load %arg1[%c0_1, %c0_2] : memref<8x16xf32, #tpu.memory_space<vmem>>, vector<8x16xf32>
    %c0_3 = arith.constant 0 : index
    %c0_4 = arith.constant 0 : index
    %2 = vector.load %arg3[%c0_3, %c0_4] : memref<16x512xf32, #tpu.memory_space<vmem>>, vector<16x512xf32>
    %cst = arith.constant dense<0.000000e+00> : vector<8x512xf32>
    %3 = tpu.matmul %1, %2, %cst {dimension_numbers = #tpu.dot_dimension_numbers<[1], [0], [0], [1], [0, 0, 1, 1], [], []>} : vector<8x16xf32>, vector<16x512xf32>, vector<8x512xf32> -> vector<8x512xf32>
    %c0_5 = arith.constant 0 : index
    %c0_6 = arith.constant 0 : index
    %4 = vector.load %arg5[%c0_5, %c0_6] : memref<1x512xf32, #tpu.memory_space<vmem>>, vector<1x512xf32>
    %5 = vector.broadcast %4 : vector<1x512xf32> to vector<8x512xf32>
    %6 = arith.addf %3, %5 : vector<8x512xf32>
    %7 = vector.extract_strided_slice %6 {offsets = [0, 0], sizes = [1, 512], strides = [1, 1]} : vector<8x512xf32> to vector<1x512xf32>
    %8 = vector.extract_strided_slice %7 {offsets = [0, 0], sizes = [1, 128], strides = [1, 1]} : vector<1x512xf32> to vector<1x128xf32>
    %9 = arith.negf %8 : vector<1x128xf32>
    %10 = math.exp %9 : vector<1x128xf32>
    %cst_7 = arith.constant 1.000000e+00 : f32
    %11 = vector.broadcast %cst_7 : f32 to vector<1x128xf32>
    %12 = arith.addf %11, %10 : vector<1x128xf32>
    %13 = arith.divf %11, %12 : vector<1x128xf32>
    %14 = vector.extract_strided_slice %7 {offsets = [0, 256], sizes = [1, 128], strides = [1, 1]} : vector<1x512xf32> to vector<1x128xf32>
    %15 = math.tanh %14 : vector<1x128xf32>
    %16 = vector.extract_strided_slice %7 {offsets = [0, 384], sizes = [1, 128], strides = [1, 1]} : vector<1x512xf32> to vector<1x128xf32>
    %17 = arith.negf %16 : vector<1x128xf32>
    %18 = math.exp %17 : vector<1x128xf32>
    %cst_8 = arith.constant 1.000000e+00 : f32
    %19 = vector.broadcast %cst_8 : f32 to vector<1x128xf32>
    %20 = arith.addf %19, %18 : vector<1x128xf32>
    %21 = arith.divf %19, %20 : vector<1x128xf32>
    %22 = arith.mulf %13, %15 : vector<1x128xf32>
    %23 = math.tanh %22 : vector<1x128xf32>
    %24 = arith.mulf %21, %23 : vector<1x128xf32>
    %25 = vector.extract_strided_slice %6 {offsets = [1, 0], sizes = [1, 512], strides = [1, 1]} : vector<8x512xf32> to vector<1x512xf32>
    %cst_9 = arith.constant dense<0.000000e+00> : vector<1x512xf32>
    %26 = tpu.matmul %24, %0, %cst_9 {dimension_numbers = #tpu.dot_dimension_numbers<[1], [0], [0], [1], [0, 0, 1, 1], [], []>} : vector<1x128xf32>, vector<128x512xf32>, vector<1x512xf32> -> vector<1x512xf32>
    %27 = arith.addf %25, %26 : vector<1x512xf32>
    %28 = vector.extract_strided_slice %27 {offsets = [0, 0], sizes = [1, 128], strides = [1, 1]} : vector<1x512xf32> to vector<1x128xf32>
    %29 = arith.negf %28 : vector<1x128xf32>
    %30 = math.exp %29 : vector<1x128xf32>
    %cst_10 = arith.constant 1.000000e+00 : f32
    %31 = vector.broadcast %cst_10 : f32 to vector<1x128xf32>
    %32 = arith.addf %31, %30 : vector<1x128xf32>
    %33 = arith.divf %31, %32 : vector<1x128xf32>
    %34 = vector.extract_strided_slice %27 {offsets = [0, 128], sizes = [1, 128], strides = [1, 1]} : vector<1x512xf32> to vector<1x128xf32>
    %35 = arith.negf %34 : vector<1x128xf32>
    %36 = math.exp %35 : vector<1x128xf32>
    %cst_11 = arith.constant 1.000000e+00 : f32
    %37 = vector.broadcast %cst_11 : f32 to vector<1x128xf32>
    %38 = arith.addf %37, %36 : vector<1x128xf32>
    %39 = arith.divf %37, %38 : vector<1x128xf32>
    %40 = vector.extract_strided_slice %27 {offsets = [0, 256], sizes = [1, 128], strides = [1, 1]} : vector<1x512xf32> to vector<1x128xf32>
    %41 = math.tanh %40 : vector<1x128xf32>
    %42 = vector.extract_strided_slice %27 {offsets = [0, 384], sizes = [1, 128], strides = [1, 1]} : vector<1x512xf32> to vector<1x128xf32>
    %43 = arith.negf %42 : vector<1x128xf32>
    %44 = math.exp %43 : vector<1x128xf32>
    %cst_12 = arith.constant 1.000000e+00 : f32
    %45 = vector.broadcast %cst_12 : f32 to vector<1x128xf32>
    %46 = arith.addf %45, %44 : vector<1x128xf32>
    %47 = arith.divf %45, %46 : vector<1x128xf32>
    %48 = arith.mulf %39, %22 : vector<1x128xf32>
    %49 = arith.mulf %33, %41 : vector<1x128xf32>
    %50 = arith.addf %48, %49 : vector<1x128xf32>
    %51 = math.tanh %50 : vector<1x128xf32>
    %52 = arith.mulf %47, %51 : vector<1x128xf32>
    %53 = vector.extract_strided_slice %6 {offsets = [2, 0], sizes = [1, 512], strides = [1, 1]} : vector<8x512xf32> to vector<1x512xf32>
    %cst_13 = arith.constant dense<0.000000e+00> : vector<1x512xf32>
    %54 = tpu.matmul %52, %0, %cst_13 {dimension_numbers = #tpu.dot_dimension_numbers<[1], [0], [0], [1], [0, 0, 1, 1], [], []>} : vector<1x128xf32>, vector<128x512xf32>, vector<1x512xf32> -> vector<1x512xf32>
    %55 = arith.addf %53, %54 : vector<1x512xf32>
    %56 = vector.extract_strided_slice %55 {offsets = [0, 0], sizes = [1, 128], strides = [1, 1]} : vector<1x512xf32> to vector<1x128xf32>
    %57 = arith.negf %56 : vector<1x128xf32>
    %58 = math.exp %57 : vector<1x128xf32>
    %cst_14 = arith.constant 1.000000e+00 : f32
    %59 = vector.broadcast %cst_14 : f32 to vector<1x128xf32>
    %60 = arith.addf %59, %58 : vector<1x128xf32>
    %61 = arith.divf %59, %60 : vector<1x128xf32>
    %62 = vector.extract_strided_slice %55 {offsets = [0, 128], sizes = [1, 128], strides = [1, 1]} : vector<1x512xf32> to vector<1x128xf32>
    %63 = arith.negf %62 : vector<1x128xf32>
    %64 = math.exp %63 : vector<1x128xf32>
    %cst_15 = arith.constant 1.000000e+00 : f32
    %65 = vector.broadcast %cst_15 : f32 to vector<1x128xf32>
    %66 = arith.addf %65, %64 : vector<1x128xf32>
    %67 = arith.divf %65, %66 : vector<1x128xf32>
    %68 = vector.extract_strided_slice %55 {offsets = [0, 256], sizes = [1, 128], strides = [1, 1]} : vector<1x512xf32> to vector<1x128xf32>
    %69 = math.tanh %68 : vector<1x128xf32>
    %70 = vector.extract_strided_slice %55 {offsets = [0, 384], sizes = [1, 128], strides = [1, 1]} : vector<1x512xf32> to vector<1x128xf32>
    %71 = arith.negf %70 : vector<1x128xf32>
    %72 = math.exp %71 : vector<1x128xf32>
    %cst_16 = arith.constant 1.000000e+00 : f32
    %73 = vector.broadcast %cst_16 : f32 to vector<1x128xf32>
    %74 = arith.addf %73, %72 : vector<1x128xf32>
    %75 = arith.divf %73, %74 : vector<1x128xf32>
    %76 = arith.mulf %67, %50 : vector<1x128xf32>
    %77 = arith.mulf %61, %69 : vector<1x128xf32>
    %78 = arith.addf %76, %77 : vector<1x128xf32>
    %79 = math.tanh %78 : vector<1x128xf32>
    %80 = arith.mulf %75, %79 : vector<1x128xf32>
    %81 = vector.extract_strided_slice %6 {offsets = [3, 0], sizes = [1, 512], strides = [1, 1]} : vector<8x512xf32> to vector<1x512xf32>
    %cst_17 = arith.constant dense<0.000000e+00> : vector<1x512xf32>
    %82 = tpu.matmul %80, %0, %cst_17 {dimension_numbers = #tpu.dot_dimension_numbers<[1], [0], [0], [1], [0, 0, 1, 1], [], []>} : vector<1x128xf32>, vector<128x512xf32>, vector<1x512xf32> -> vector<1x512xf32>
    %83 = arith.addf %81, %82 : vector<1x512xf32>
    %84 = vector.extract_strided_slice %83 {offsets = [0, 0], sizes = [1, 128], strides = [1, 1]} : vector<1x512xf32> to vector<1x128xf32>
    %85 = arith.negf %84 : vector<1x128xf32>
    %86 = math.exp %85 : vector<1x128xf32>
    %cst_18 = arith.constant 1.000000e+00 : f32
    %87 = vector.broadcast %cst_18 : f32 to vector<1x128xf32>
    %88 = arith.addf %87, %86 : vector<1x128xf32>
    %89 = arith.divf %87, %88 : vector<1x128xf32>
    %90 = vector.extract_strided_slice %83 {offsets = [0, 128], sizes = [1, 128], strides = [1, 1]} : vector<1x512xf32> to vector<1x128xf32>
    %91 = arith.negf %90 : vector<1x128xf32>
    %92 = math.exp %91 : vector<1x128xf32>
    %cst_19 = arith.constant 1.000000e+00 : f32
    %93 = vector.broadcast %cst_19 : f32 to vector<1x128xf32>
    %94 = arith.addf %93, %92 : vector<1x128xf32>
    %95 = arith.divf %93, %94 : vector<1x128xf32>
    %96 = vector.extract_strided_slice %83 {offsets = [0, 256], sizes = [1, 128], strides = [1, 1]} : vector<1x512xf32> to vector<1x128xf32>
    %97 = math.tanh %96 : vector<1x128xf32>
    %98 = vector.extract_strided_slice %83 {offsets = [0, 384], sizes = [1, 128], strides = [1, 1]} : vector<1x512xf32> to vector<1x128xf32>
    %99 = arith.negf %98 : vector<1x128xf32>
    %100 = math.exp %99 : vector<1x128xf32>
    %cst_20 = arith.constant 1.000000e+00 : f32
    %101 = vector.broadcast %cst_20 : f32 to vector<1x128xf32>
    %102 = arith.addf %101, %100 : vector<1x128xf32>
    %103 = arith.divf %101, %102 : vector<1x128xf32>
    %104 = arith.mulf %95, %78 : vector<1x128xf32>
    %105 = arith.mulf %89, %97 : vector<1x128xf32>
    %106 = arith.addf %104, %105 : vector<1x128xf32>
    %107 = math.tanh %106 : vector<1x128xf32>
    %108 = arith.mulf %103, %107 : vector<1x128xf32>
    %109 = vector.extract_strided_slice %6 {offsets = [4, 0], sizes = [1, 512], strides = [1, 1]} : vector<8x512xf32> to vector<1x512xf32>
    %cst_21 = arith.constant dense<0.000000e+00> : vector<1x512xf32>
    %110 = tpu.matmul %108, %0, %cst_21 {dimension_numbers = #tpu.dot_dimension_numbers<[1], [0], [0], [1], [0, 0, 1, 1], [], []>} : vector<1x128xf32>, vector<128x512xf32>, vector<1x512xf32> -> vector<1x512xf32>
    %111 = arith.addf %109, %110 : vector<1x512xf32>
    %112 = vector.extract_strided_slice %111 {offsets = [0, 0], sizes = [1, 128], strides = [1, 1]} : vector<1x512xf32> to vector<1x128xf32>
    %113 = arith.negf %112 : vector<1x128xf32>
    %114 = math.exp %113 : vector<1x128xf32>
    %cst_22 = arith.constant 1.000000e+00 : f32
    %115 = vector.broadcast %cst_22 : f32 to vector<1x128xf32>
    %116 = arith.addf %115, %114 : vector<1x128xf32>
    %117 = arith.divf %115, %116 : vector<1x128xf32>
    %118 = vector.extract_strided_slice %111 {offsets = [0, 128], sizes = [1, 128], strides = [1, 1]} : vector<1x512xf32> to vector<1x128xf32>
    %119 = arith.negf %118 : vector<1x128xf32>
    %120 = math.exp %119 : vector<1x128xf32>
    %cst_23 = arith.constant 1.000000e+00 : f32
    %121 = vector.broadcast %cst_23 : f32 to vector<1x128xf32>
    %122 = arith.addf %121, %120 : vector<1x128xf32>
    %123 = arith.divf %121, %122 : vector<1x128xf32>
    %124 = vector.extract_strided_slice %111 {offsets = [0, 256], sizes = [1, 128], strides = [1, 1]} : vector<1x512xf32> to vector<1x128xf32>
    %125 = math.tanh %124 : vector<1x128xf32>
    %126 = vector.extract_strided_slice %111 {offsets = [0, 384], sizes = [1, 128], strides = [1, 1]} : vector<1x512xf32> to vector<1x128xf32>
    %127 = arith.negf %126 : vector<1x128xf32>
    %128 = math.exp %127 : vector<1x128xf32>
    %cst_24 = arith.constant 1.000000e+00 : f32
    %129 = vector.broadcast %cst_24 : f32 to vector<1x128xf32>
    %130 = arith.addf %129, %128 : vector<1x128xf32>
    %131 = arith.divf %129, %130 : vector<1x128xf32>
    %132 = arith.mulf %123, %106 : vector<1x128xf32>
    %133 = arith.mulf %117, %125 : vector<1x128xf32>
    %134 = arith.addf %132, %133 : vector<1x128xf32>
    %135 = math.tanh %134 : vector<1x128xf32>
    %136 = arith.mulf %131, %135 : vector<1x128xf32>
    %137 = vector.extract_strided_slice %6 {offsets = [5, 0], sizes = [1, 512], strides = [1, 1]} : vector<8x512xf32> to vector<1x512xf32>
    %cst_25 = arith.constant dense<0.000000e+00> : vector<1x512xf32>
    %138 = tpu.matmul %136, %0, %cst_25 {dimension_numbers = #tpu.dot_dimension_numbers<[1], [0], [0], [1], [0, 0, 1, 1], [], []>} : vector<1x128xf32>, vector<128x512xf32>, vector<1x512xf32> -> vector<1x512xf32>
    %139 = arith.addf %137, %138 : vector<1x512xf32>
    %140 = vector.extract_strided_slice %139 {offsets = [0, 0], sizes = [1, 128], strides = [1, 1]} : vector<1x512xf32> to vector<1x128xf32>
    %141 = arith.negf %140 : vector<1x128xf32>
    %142 = math.exp %141 : vector<1x128xf32>
    %cst_26 = arith.constant 1.000000e+00 : f32
    %143 = vector.broadcast %cst_26 : f32 to vector<1x128xf32>
    %144 = arith.addf %143, %142 : vector<1x128xf32>
    %145 = arith.divf %143, %144 : vector<1x128xf32>
    %146 = vector.extract_strided_slice %139 {offsets = [0, 128], sizes = [1, 128], strides = [1, 1]} : vector<1x512xf32> to vector<1x128xf32>
    %147 = arith.negf %146 : vector<1x128xf32>
    %148 = math.exp %147 : vector<1x128xf32>
    %cst_27 = arith.constant 1.000000e+00 : f32
    %149 = vector.broadcast %cst_27 : f32 to vector<1x128xf32>
    %150 = arith.addf %149, %148 : vector<1x128xf32>
    %151 = arith.divf %149, %150 : vector<1x128xf32>
    %152 = vector.extract_strided_slice %139 {offsets = [0, 256], sizes = [1, 128], strides = [1, 1]} : vector<1x512xf32> to vector<1x128xf32>
    %153 = math.tanh %152 : vector<1x128xf32>
    %154 = vector.extract_strided_slice %139 {offsets = [0, 384], sizes = [1, 128], strides = [1, 1]} : vector<1x512xf32> to vector<1x128xf32>
    %155 = arith.negf %154 : vector<1x128xf32>
    %156 = math.exp %155 : vector<1x128xf32>
    %cst_28 = arith.constant 1.000000e+00 : f32
    %157 = vector.broadcast %cst_28 : f32 to vector<1x128xf32>
    %158 = arith.addf %157, %156 : vector<1x128xf32>
    %159 = arith.divf %157, %158 : vector<1x128xf32>
    %160 = arith.mulf %151, %134 : vector<1x128xf32>
    %161 = arith.mulf %145, %153 : vector<1x128xf32>
    %162 = arith.addf %160, %161 : vector<1x128xf32>
    %163 = math.tanh %162 : vector<1x128xf32>
    %164 = arith.mulf %159, %163 : vector<1x128xf32>
    %165 = vector.extract_strided_slice %6 {offsets = [6, 0], sizes = [1, 512], strides = [1, 1]} : vector<8x512xf32> to vector<1x512xf32>
    %cst_29 = arith.constant dense<0.000000e+00> : vector<1x512xf32>
    %166 = tpu.matmul %164, %0, %cst_29 {dimension_numbers = #tpu.dot_dimension_numbers<[1], [0], [0], [1], [0, 0, 1, 1], [], []>} : vector<1x128xf32>, vector<128x512xf32>, vector<1x512xf32> -> vector<1x512xf32>
    %167 = arith.addf %165, %166 : vector<1x512xf32>
    %168 = vector.extract_strided_slice %167 {offsets = [0, 0], sizes = [1, 128], strides = [1, 1]} : vector<1x512xf32> to vector<1x128xf32>
    %169 = arith.negf %168 : vector<1x128xf32>
    %170 = math.exp %169 : vector<1x128xf32>
    %cst_30 = arith.constant 1.000000e+00 : f32
    %171 = vector.broadcast %cst_30 : f32 to vector<1x128xf32>
    %172 = arith.addf %171, %170 : vector<1x128xf32>
    %173 = arith.divf %171, %172 : vector<1x128xf32>
    %174 = vector.extract_strided_slice %167 {offsets = [0, 128], sizes = [1, 128], strides = [1, 1]} : vector<1x512xf32> to vector<1x128xf32>
    %175 = arith.negf %174 : vector<1x128xf32>
    %176 = math.exp %175 : vector<1x128xf32>
    %cst_31 = arith.constant 1.000000e+00 : f32
    %177 = vector.broadcast %cst_31 : f32 to vector<1x128xf32>
    %178 = arith.addf %177, %176 : vector<1x128xf32>
    %179 = arith.divf %177, %178 : vector<1x128xf32>
    %180 = vector.extract_strided_slice %167 {offsets = [0, 256], sizes = [1, 128], strides = [1, 1]} : vector<1x512xf32> to vector<1x128xf32>
    %181 = math.tanh %180 : vector<1x128xf32>
    %182 = vector.extract_strided_slice %167 {offsets = [0, 384], sizes = [1, 128], strides = [1, 1]} : vector<1x512xf32> to vector<1x128xf32>
    %183 = arith.negf %182 : vector<1x128xf32>
    %184 = math.exp %183 : vector<1x128xf32>
    %cst_32 = arith.constant 1.000000e+00 : f32
    %185 = vector.broadcast %cst_32 : f32 to vector<1x128xf32>
    %186 = arith.addf %185, %184 : vector<1x128xf32>
    %187 = arith.divf %185, %186 : vector<1x128xf32>
    %188 = arith.mulf %179, %162 : vector<1x128xf32>
    %189 = arith.mulf %173, %181 : vector<1x128xf32>
    %190 = arith.addf %188, %189 : vector<1x128xf32>
    %191 = math.tanh %190 : vector<1x128xf32>
    %192 = arith.mulf %187, %191 : vector<1x128xf32>
    %193 = vector.extract_strided_slice %6 {offsets = [7, 0], sizes = [1, 512], strides = [1, 1]} : vector<8x512xf32> to vector<1x512xf32>
    %cst_33 = arith.constant dense<0.000000e+00> : vector<1x512xf32>
    %194 = tpu.matmul %192, %0, %cst_33 {dimension_numbers = #tpu.dot_dimension_numbers<[1], [0], [0], [1], [0, 0, 1, 1], [], []>} : vector<1x128xf32>, vector<128x512xf32>, vector<1x512xf32> -> vector<1x512xf32>
    %195 = arith.addf %193, %194 : vector<1x512xf32>
    %196 = vector.extract_strided_slice %195 {offsets = [0, 0], sizes = [1, 128], strides = [1, 1]} : vector<1x512xf32> to vector<1x128xf32>
    %197 = arith.negf %196 : vector<1x128xf32>
    %198 = math.exp %197 : vector<1x128xf32>
    %cst_34 = arith.constant 1.000000e+00 : f32
    %199 = vector.broadcast %cst_34 : f32 to vector<1x128xf32>
    %200 = arith.addf %199, %198 : vector<1x128xf32>
    %201 = arith.divf %199, %200 : vector<1x128xf32>
    %202 = vector.extract_strided_slice %195 {offsets = [0, 128], sizes = [1, 128], strides = [1, 1]} : vector<1x512xf32> to vector<1x128xf32>
    %203 = arith.negf %202 : vector<1x128xf32>
    %204 = math.exp %203 : vector<1x128xf32>
    %cst_35 = arith.constant 1.000000e+00 : f32
    %205 = vector.broadcast %cst_35 : f32 to vector<1x128xf32>
    %206 = arith.addf %205, %204 : vector<1x128xf32>
    %207 = arith.divf %205, %206 : vector<1x128xf32>
    %208 = vector.extract_strided_slice %195 {offsets = [0, 256], sizes = [1, 128], strides = [1, 1]} : vector<1x512xf32> to vector<1x128xf32>
    %209 = math.tanh %208 : vector<1x128xf32>
    %210 = vector.extract_strided_slice %195 {offsets = [0, 384], sizes = [1, 128], strides = [1, 1]} : vector<1x512xf32> to vector<1x128xf32>
    %211 = arith.negf %210 : vector<1x128xf32>
    %212 = math.exp %211 : vector<1x128xf32>
    %cst_36 = arith.constant 1.000000e+00 : f32
    %213 = vector.broadcast %cst_36 : f32 to vector<1x128xf32>
    %214 = arith.addf %213, %212 : vector<1x128xf32>
    %215 = arith.divf %213, %214 : vector<1x128xf32>
    %216 = arith.mulf %207, %190 : vector<1x128xf32>
    %217 = arith.mulf %201, %209 : vector<1x128xf32>
    %218 = arith.addf %216, %217 : vector<1x128xf32>
    %219 = math.tanh %218 : vector<1x128xf32>
    %220 = arith.mulf %215, %219 : vector<1x128xf32>
    %c0_37 = arith.constant 0 : index
    %c0_38 = arith.constant 0 : index
    %221 = vector.load %arg6[%c0_37, %c0_38] : memref<128x8xf32, #tpu.memory_space<vmem>>, vector<128x8xf32>
    %cst_39 = arith.constant dense<0.000000e+00> : vector<1x8xf32>
    %222 = tpu.matmul %220, %221, %cst_39 {dimension_numbers = #tpu.dot_dimension_numbers<[1], [0], [0], [1], [0, 0, 1, 1], [], []>} : vector<1x128xf32>, vector<128x8xf32>, vector<1x8xf32> -> vector<1x8xf32>
    %c0_40 = arith.constant 0 : index
    %c0_41 = arith.constant 0 : index
    %223 = vector.load %arg2[%c0_40, %c0_41] : memref<1x16xf32, #tpu.memory_space<vmem>>, vector<1x16xf32>
    %c0_42 = arith.constant 0 : index
    %c0_43 = arith.constant 0 : index
    %224 = vector.load %arg7[%c0_42, %c0_43] : memref<16x8xf32, #tpu.memory_space<vmem>>, vector<16x8xf32>
    %cst_44 = arith.constant dense<0.000000e+00> : vector<1x8xf32>
    %225 = tpu.matmul %223, %224, %cst_44 {dimension_numbers = #tpu.dot_dimension_numbers<[1], [0], [0], [1], [0, 0, 1, 1], [], []>} : vector<1x16xf32>, vector<16x8xf32>, vector<1x8xf32> -> vector<1x8xf32>
    %226 = arith.addf %222, %225 : vector<1x8xf32>
    %c0_45 = arith.constant 0 : index
    %c0_46 = arith.constant 0 : index
    %227 = vector.load %arg8[%c0_45, %c0_46] : memref<1x8xf32, #tpu.memory_space<vmem>>, vector<1x8xf32>
    %228 = arith.addf %226, %227 : vector<1x8xf32>
    %cst_47 = arith.constant dense<0xFF800000> : vector<1xf32>
    %229 = vector.multi_reduction <maximumf>, %228, %cst_47 [1] : vector<1x8xf32> to vector<1xf32>
    %230 = vector.shape_cast %229 : vector<1xf32> to vector<1x1xf32>
    %231 = vector.broadcast %230 : vector<1x1xf32> to vector<1x8xf32>
    %232 = arith.subf %228, %231 : vector<1x8xf32>
    %233 = math.exp %232 : vector<1x8xf32>
    %cst_48 = arith.constant dense<0.000000e+00> : vector<1xf32>
    %234 = vector.multi_reduction <add>, %233, %cst_48 [1] : vector<1x8xf32> to vector<1xf32>
    %235 = vector.shape_cast %234 : vector<1xf32> to vector<1x1xf32>
    %236 = math.log %235 : vector<1x1xf32>
    %237 = arith.addf %236, %230 : vector<1x1xf32>
    %238 = vector.broadcast %237 : vector<1x1xf32> to vector<1x8xf32>
    %239 = arith.subf %228, %238 : vector<1x8xf32>
    %c0_49 = arith.constant 0 : index
    %c0_50 = arith.constant 0 : index
    %240 = vector.load %arg9[%c0_49, %c0_50] : memref<1x8xf32, #tpu.memory_space<vmem>>, vector<1x8xf32>
    tpu.vector_store %arg9[%c0_49, %c0_50], %239 {strides = array<i32>} : memref<1x8xf32, #tpu.memory_space<vmem>>, vector<1x8xf32>,
    return
  }
  func.func @transform_0(%arg0: i32) -> (i32, i32) {
    %c0_i32 = arith.constant 0 : i32
    %c0_i32_0 = arith.constant 0 : i32
    %c0_i32_1 = arith.constant 0 : i32
    return %c0_i32, %c0_i32_0 : i32, i32
  }
  func.func @transform_1(%arg0: i32) -> (i32, i32) {
    %c0_i32 = arith.constant 0 : i32
    %c0_i32_0 = arith.constant 0 : i32
    %c0_i32_1 = arith.constant 0 : i32
    return %c0_i32, %c0_i32_0 : i32, i32
  }
  func.func @transform_2(%arg0: i32) -> (i32, i32) {
    %c0_i32 = arith.constant 0 : i32
    %c0_i32_0 = arith.constant 0 : i32
    %c0_i32_1 = arith.constant 0 : i32
    return %c0_i32, %c0_i32_0 : i32, i32
  }
  func.func @transform_3(%arg0: i32) -> (i32, i32) {
    %c0_i32 = arith.constant 0 : i32
    %c0_i32_0 = arith.constant 0 : i32
    %c0_i32_1 = arith.constant 0 : i32
    return %c0_i32, %c0_i32_0 : i32, i32
  }
  func.func @transform_4(%arg0: i32) -> (i32, i32) {
    %c0_i32 = arith.constant 0 : i32
    %c0_i32_0 = arith.constant 0 : i32
    %c0_i32_1 = arith.constant 0 : i32
    return %c0_i32, %c0_i32_0 : i32, i32
  }
  func.func @transform_5(%arg0: i32) -> (i32, i32) {
    %c0_i32 = arith.constant 0 : i32
    %c0_i32_0 = arith.constant 0 : i32
    %c0_i32_1 = arith.constant 0 : i32
    return %c0_i32, %c0_i32_0 : i32, i32
  }
  func.func @transform_6(%arg0: i32) -> (i32, i32) {
    %c0_i32 = arith.constant 0 : i32
    %c0_i32_0 = arith.constant 0 : i32
    %c0_i32_1 = arith.constant 0 : i32
    return %c0_i32, %c0_i32_0 : i32, i32
  }
  func.func @transform_7(%arg0: i32) -> (i32, i32) {
    %c0_i32 = arith.constant 0 : i32
    %c0_i32_0 = arith.constant 0 : i32
    %c0_i32_1 = arith.constant 0 : i32
    return %c0_i32, %c0_i32_0 : i32, i32
  }
  func.func @transform_8(%arg0: i32) -> (i32, i32) {
    %c0_i32 = arith.constant 0 : i32
    %c0_i32_0 = arith.constant 0 : i32
    %c0_i32_1 = arith.constant 0 : i32
    return %c0_i32, %c0_i32_0 : i32, i32
  }
}

</mosaic_0001>

<llo_original>
// kernel: tpu_custom_call.1
$region0: #{tpu_custom_call.1}
  #allocation0 [shape = 'u32[]', space=smem, size = 0x4, offset = 0x4, fixed_abs, tag = 'smem constant byte address 0x4 - core index']
  #allocation1 [shape = 'u32[144,128]{1,0:T(1,128)}', space=vmem, size = 0x12000, scoped, tag = 'internal scratch']
  %s0 = inlined_call_operand.vmem [shape: f32[8,16], index: 0, kind: input, shape index: {}]
  %s1 = inlined_call_operand.vmem [shape: f32[1,16], index: 1, kind: input, shape index: {}]
  %s2 = inlined_call_operand.vmem [shape: f32[16,512], index: 2, kind: input, shape index: {}]
  %s3 = inlined_call_operand.hbm [shape: f32[128,512], index: 3, kind: input, shape index: {}]
  %s4 = inlined_call_operand.vmem [shape: f32[1,512], index: 4, kind: input, shape index: {}]
  %s5 = inlined_call_operand.vmem [shape: f32[128,8], index: 5, kind: input, shape index: {}]
  %s6 = inlined_call_operand.vmem [shape: f32[16,8], index: 6, kind: input, shape index: {}]
  %s7 = inlined_call_operand.vmem [shape: f32[1,8], index: 7, kind: input, shape index: {}]
  %s8 = inlined_call_operand.hbm [shape: f32[1,8], index: 8, kind: output, shape index: {}]
  %s9 = sld [smem:[#allocation0]]
  $region46: #{tpu_custom_call.1} parent=0
    _
  %s11 = ssub.s32 1, %s9
  %s12 = scalar_select 0, %s11, %s9
  $region1: #{tpu_custom_call.1} parent=0
    #allocation2 [shape = 'u8[262144]{0}', space=vmem, size = 0x40000, scoped, tag = 'input window, operand 3, single buffered']
    #allocation3 [shape = 's32[1]{0}', space=sflag, size = 0x4, scoped, tag = 'scoped memory for tpu_custom_call.1']
    #allocation4 [shape = 's32[1]{0}', space=sflag, size = 0x4, scoped, tag = 'scoped memory for tpu_custom_call.1']
    #allocation5 [shape = 'u8[512]{0}', space=vmem, size = 0x400, scoped, tag = 'output window, operand 0, single buffered']
    %13 = vsyncpa [#allocation3], 0
    %14 = vsyncpa [#allocation4], 0
    // Predicated region
    $region2: #{tpu_custom_call.1} parent=1 // pred_check
      _
    $region3: #{tpu_custom_call.1} parent=1 // pred_check_branch
      %16 = sbr.rel (0) target = $region5
    $region4: #{tpu_custom_call.1} parent=1 // pred_region
      _
    $region5: #{tpu_custom_call.1} parent=1 // pred_fallthru
      _
    // Predicated region
    $region6: #{tpu_custom_call.1} parent=1 // pred_check
      _
    $region7: #{tpu_custom_call.1} parent=1 // pred_check_branch
      %18 = sbr.rel (0) target = $region9
    $region8: #{tpu_custom_call.1} parent=1 // pred_region
      _
    $region9: #{tpu_custom_call.1} parent=1 // pred_fallthru
      _
    // Predicated region
    $region10: #{tpu_custom_call.1} parent=1 // pred_check
      _
    $region11: #{tpu_custom_call.1} parent=1 // pred_check_branch
      %20 = sbr.rel (0) target = $region13
    $region12: #{tpu_custom_call.1} parent=1 // pred_region
      _
    $region13: #{tpu_custom_call.1} parent=1 // pred_fallthru
      _
    // Predicated region
    $region14: #{tpu_custom_call.1} parent=1 // pred_check
      _
    $region15: #{tpu_custom_call.1} parent=1 // pred_check_branch
      %22 = sbr.rel (0) target = $region17
    $region16: #{tpu_custom_call.1} parent=1 // pred_region
      %s24 = ssub.s32 8192, 8192
      %25 = vsyncadd [#allocation3], %s24
      %s26 = sshll.u32 [#allocation2], 4
      %s27 = int_to_ptr.vmem [resolvable:$true] %s26
      %32 = dma.hbm_to_vmem [thread:$0]  %s3, 8192, %s27, [#allocation3], 512, 512, 32
    $region17: #{tpu_custom_call.1} parent=1 // pred_fallthru
      _
    // Predicated region
    $region18: #{tpu_custom_call.1} parent=1 // pred_check
      _
    $region19: #{tpu_custom_call.1} parent=1 // pred_check_branch
      %34 = sbr.rel (0) target = $region21
    $region20: #{tpu_custom_call.1} parent=1 // pred_region
      _
    $region21: #{tpu_custom_call.1} parent=1 // pred_fallthru
      _
    // Predicated region
    $region22: #{tpu_custom_call.1} parent=1 // pred_check
      _
    $region23: #{tpu_custom_call.1} parent=1 // pred_check_branch
      %36 = sbr.rel (0) target = $region25
    $region24: #{tpu_custom_call.1} parent=1 // pred_region
      _
    $region25: #{tpu_custom_call.1} parent=1 // pred_fallthru
      _
    // Predicated region
    $region26: #{tpu_custom_call.1} parent=1 // pred_check
      _
    $region27: #{tpu_custom_call.1} parent=1 // pred_check_branch
      %38 = sbr.rel (0) target = $region29
    $region28: #{tpu_custom_call.1} parent=1 // pred_region
      _
    $region29: #{tpu_custom_call.1} parent=1 // pred_fallthru
      _
    // Predicated region
    $region30: #{tpu_custom_call.1} parent=1 // pred_check
      _
    $region31: #{tpu_custom_call.1} parent=1 // pred_check_branch
      %40 = sbr.rel (0) target = $region33
    $region32: #{tpu_custom_call.1} parent=1 // pred_region
      _
    $region33: #{tpu_custom_call.1} parent=1 // pred_fallthru
      _
    // Predicated region
    $region34: #{tpu_custom_call.1} parent=1 // pred_check
      _
    $region35: #{tpu_custom_call.1} parent=1 // pred_check_branch
      %42 = sbr.rel (0) target = $region37
    $region36: #{tpu_custom_call.1} parent=1 // pred_region
      %43 = dma.done [#allocation3], 8192
    $region37: #{tpu_custom_call.1} parent=1 // pred_fallthru
      _
    %v44 = vld [vmem:[#allocation2] sm:$0xff]
    %v45 = vld [vmem:[#allocation2 + $0x8] sm:$0xff]
    %v46 = vld [vmem:[#allocation2 + $0x10] sm:$0xff]
    %v47 = vld [vmem:[#allocation2 + $0x18] sm:$0xff]
    %v48 = vld [vmem:[#allocation2 + $0x20] sm:$0xff]
    %v49 = vld [vmem:[#allocation2 + $0x28] sm:$0xff]
    %v50 = vld [vmem:[#allocation2 + $0x30] sm:$0xff]
    %v51 = vld [vmem:[#allocation2 + $0x38] sm:$0xff]
    %v52 = vld [vmem:[#allocation2 + $0x40] sm:$0xff]
    %v53 = vld [vmem:[#allocation2 + $0x48] sm:$0xff]
    %v54 = vld [vmem:[#allocation2 + $0x50] sm:$0xff]
    %v55 = vld [vmem:[#allocation2 + $0x58] sm:$0xff]
    %v56 = vld [vmem:[#allocation2 + $0x60] sm:$0xff]
    %v57 = vld [vmem:[#allocation2 + $0x68] sm:$0xff]
    %v58 = vld [vmem:[#allocation2 + $0x70] sm:$0xff]
    %v59 = vld [vmem:[#allocation2 + $0x78] sm:$0xff]
    %v60 = vld [vmem:[#allocation2 + $0x80] sm:$0xff]
    %v61 = vld [vmem:[#allocation2 + $0x88] sm:$0xff]
    %v62 = vld [vmem:[#allocation2 + $0x90] sm:$0xff]
    %v63 = vld [vmem:[#allocation2 + $0x98] sm:$0xff]
    %v64 = vld [vmem:[#allocation2 + $0xa0] sm:$0xff]
    %v65 = vld [vmem:[#allocation2 + $0xa8] sm:$0xff]
    %v66 = vld [vmem:[#allocation2 + $0xb0] sm:$0xff]
    %v67 = vld [vmem:[#allocation2 + $0xb8] sm:$0xff]
    %v68 = vld [vmem:[#allocation2 + $0xc0] sm:$0xff]
    %v69 = vld [vmem:[#allocation2 + $0xc8] sm:$0xff]
    %v70 = vld [vmem:[#allocation2 + $0xd0] sm:$0xff]
    %v71 = vld [vmem:[#allocation2 + $0xd8] sm:$0xff]
    %v72 = vld [vmem:[#allocation2 + $0xe0] sm:$0xff]
    %v73 = vld [vmem:[#allocation2 + $0xe8] sm:$0xff]
    %v74 = vld [vmem:[#allocation2 + $0xf0] sm:$0xff]
    %v75 = vld [vmem:[#allocation2 + $0xf8] sm:$0xff]
    %v76 = vld [vmem:[#allocation2 + $0x100] sm:$0xff]
    %v77 = vld [vmem:[#allocation2 + $0x108] sm:$0xff]
    %v78 = vld [vmem:[#allocation2 + $0x110] sm:$0xff]
    %v79 = vld [vmem:[#allocation2 + $0x118] sm:$0xff]
    %v80 = vld [vmem:[#allocation2 + $0x120] sm:$0xff]
    %v81 = vld [vmem:[#allocation2 + $0x128] sm:$0xff]
    %v82 = vld [vmem:[#allocation2 + $0x130] sm:$0xff]
    %v83 = vld [vmem:[#allocation2 + $0x138] sm:$0xff]
    %v84 = vld [vmem:[#allocation2 + $0x140] sm:$0xff]
    %v85 = vld [vmem:[#allocation2 + $0x148] sm:$0xff]
    %v86 = vld [vmem:[#allocation2 + $0x150] sm:$0xff]
    %v87 = vld [vmem:[#allocation2 + $0x158] sm:$0xff]
    %v88 = vld [vmem:[#allocation2 + $0x160] sm:$0xff]
    %v89 = vld [vmem:[#allocation2 + $0x168] sm:$0xff]
    %v90 = vld [vmem:[#allocation2 + $0x170] sm:$0xff]
    %v91 = vld [vmem:[#allocation2 + $0x178] sm:$0xff]
    %v92 = vld [vmem:[#allocation2 + $0x180] sm:$0xff]
    %v93 = vld [vmem:[#allocation2 + $0x188] sm:$0xff]
    %v94 = vld [vmem:[#allocation2 + $0x190] sm:$0xff]
    %v95 = vld [vmem:[#allocation2 + $0x198] sm:$0xff]
    %v96 = vld [vmem:[#allocation2 + $0x1a0] sm:$0xff]
    %v97 = vld [vmem:[#allocation2 + $0x1a8] sm:$0xff]
    %v98 = vld [vmem:[#allocation2 + $0x1b0] sm:$0xff]
    %v99 = vld [vmem:[#allocation2 + $0x1b8] sm:$0xff]
    %v100 = vld [vmem:[#allocation2 + $0x1c0] sm:$0xff]
    %v101 = vld [vmem:[#allocation2 + $0x1c8] sm:$0xff]
    %v102 = vld [vmem:[#allocation2 + $0x1d0] sm:$0xff]
    %v103 = vld [vmem:[#allocation2 + $0x1d8] sm:$0xff]
    %v104 = vld [vmem:[#allocation2 + $0x1e0] sm:$0xff]
    %v105 = vld [vmem:[#allocation2 + $0x1e8] sm:$0xff]
    %v106 = vld [vmem:[#allocation2 + $0x1f0] sm:$0xff]
    %v107 = vld [vmem:[#allocation2 + $0x1f8] sm:$0xff]
    %v108 = vld [vmem:[%s0] sm:$0xff]
    %v109 = vld [vmem:[%s2] sm:$0xff]
    %v110 = vld [vmem:[%s2 + $0x8] sm:$0xff]
    %v111 = vld [vmem:[%s2 + $0x10] sm:$0xff]
    %v112 = vld [vmem:[%s2 + $0x18] sm:$0xff]
    %v113 = vld [vmem:[%s2 + $0x20] sm:$0xff]
    %v114 = vld [vmem:[%s2 + $0x28] sm:$0xff]
    %v115 = vld [vmem:[%s2 + $0x30] sm:$0xff]
    %v116 = vld [vmem:[%s2 + $0x38] sm:$0xff]
    %v117 = vld [vmem:[%s4] sm:$0xf]
    %v119 = vlaneseq
    %v120 = vshrl.u32 %v119, 7
    %v121 = vsub.s32 0, %v120
    %v122 = vrot.slane %v117, %v121
    %v123 = vlaneseq
    %v124 = vshrl.u32 %v123, 7
    %v125 = vsub.s32 1, %v124
    %v126 = vrot.slane %v117, %v125
    %v127 = vlaneseq
    %v128 = vshrl.u32 %v127, 7
    %v129 = vsub.s32 2, %v128
    %v130 = vrot.slane %v117, %v129
    %v131 = vlaneseq
    %v132 = vshrl.u32 %v131, 7
    %v133 = vsub.s32 3, %v132
    %v134 = vrot.slane %v117, %v133
    %vm139 = vcmask 130048
    %v141 = vsel %vm139, %v108, 0
    %143 = vmatprep.subr.mxu0 %v110
    %144 = vmatpush1.msra.mxu0 %v109
    %145 = vmatprep.subr.mxu0 %v114
    %146 = vmatpush1.msra.mxu0 %v113
    %147 = vmatprep.subr.mxu0 0.0
    %148 = vmatpush1.msra.mxu0 0.0
    %149 = vmatprep.subr.mxu0 0.0
    %150 = vmatpush1.msra.mxu0 0.0
    %151 = vmatprep.subr.mxu0 0.0
    %152 = vmatpush1.msra.mxu0 0.0
    %153 = vmatprep.subr.mxu0 0.0
    %154 = vmatpush1.msra.mxu0 0.0
    %155 = vmatprep.subr.mxu0 0.0
    %156 = vmatpush1.msra.mxu0 0.0
    %157 = vmatprep.subr.mxu0 0.0
    %158 = vmatpush1.msra.mxu0 0.0
    %159 = vmatprep.subr.mxu0 0.0
    %160 = vmatpush1.msra.mxu0 0.0
    %161 = vmatprep.subr.mxu0 0.0
    %162 = vmatpush1.msra.mxu0 0.0
    %163 = vmatprep.subr.mxu0 0.0
    %164 = vmatpush1.msra.mxu0 0.0
    %165 = vmatprep.subr.mxu0 0.0
    %166 = vmatpush1.msra.mxu0 0.0
    %167 = vmatprep.subr.mxu0 0.0
    %168 = vmatpush1.msra.mxu0 0.0
    %169 = vmatprep.subr.mxu0 0.0
    %170 = vmatpush1.msra.mxu0 0.0
    %171 = vmatprep.subr.mxu0 0.0
    %172 = vmatpush1.msra.mxu0 0.0
    %173 = vmatprep.subr.mxu0 0.0
    %174 = vmatpush1.msra.mxu0 0.0
    %175 = vmatprep.subr.mxu0 0.0
    %176 = vmatpush1.msra.mxu0 0.0
    %177 = vmatprep.subr.mxu0 0.0
    %178 = vmatpush1.msra.mxu0 0.0
    %179 = vmatprep.subr.mxu0 0.0
    %180 = vmatpush1.msra.mxu0 0.0
    %181 = vmatprep.subr.mxu0 0.0
    %182 = vmatpush1.msra.mxu0 0.0
    %183 = vmatprep.subr.mxu0 0.0
    %184 = vmatpush1.msra.mxu0 0.0
    %185 = vmatprep.subr.mxu0 0.0
    %186 = vmatpush1.msra.mxu0 0.0
    %187 = vmatprep.subr.mxu0 0.0
    %188 = vmatpush1.msra.mxu0 0.0
    %189 = vmatprep.subr.mxu0 0.0
    %190 = vmatpush1.msra.mxu0 0.0
    %191 = vmatprep.subr.mxu0 0.0
    %192 = vmatpush1.msra.mxu0 0.0
    %193 = vmatprep.subr.mxu0 0.0
    %194 = vmatpush1.msra.mxu0 0.0
    %195 = vmatprep.subr.mxu0 0.0
    %196 = vmatpush1.msra.mxu0 0.0
    %197 = vmatprep.subr.mxu0 0.0
    %198 = vmatpush1.msra.mxu0 0.0
    %199 = vmatprep.subr.mxu0 0.0
    %200 = vmatpush1.msra.mxu0 0.0
    %201 = vmatprep.subr.mxu0 0.0
    %202 = vmatpush1.msra.mxu0 0.0
    %203 = vmatprep.subr.mxu0 0.0
    %204 = vmatpush1.msra.mxu0 0.0
    %205 = vmatprep.subr.mxu0 0.0
    %206 = vmatpush1.msra.mxu0 0.0
    %207 = vmatprep.mubr.f32.mxu0 0.0
    %208 = vmatmul.mubr.f32.gmra.mrb[0].mxu0 %v141
    %v209 = vpop.f32.mrb[0].mxu0
    %v210 = vadd.f32 %v122, %v209
    %v211 = vpop.f32.mrb[0].mxu0
    %v212 = vadd.f32 %v126, %v211
    %213 = vdwg.mxu0
    %214 = vmatprep.subr.mxu0 %v112
    %215 = vmatpush1.msra.mxu0 %v111
    %216 = vmatprep.subr.mxu0 %v116
    %217 = vmatpush1.msra.mxu0 %v115
    %218 = vmatprep.subr.mxu0 0.0
    %219 = vmatpush1.msra.mxu0 0.0
    %220 = vmatprep.subr.mxu0 0.0
    %221 = vmatpush1.msra.mxu0 0.0
    %222 = vmatprep.subr.mxu0 0.0
    %223 = vmatpush1.msra.mxu0 0.0
    %224 = vmatprep.subr.mxu0 0.0
    %225 = vmatpush1.msra.mxu0 0.0
    %226 = vmatprep.subr.mxu0 0.0
    %227 = vmatpush1.msra.mxu0 0.0
    %228 = vmatprep.subr.mxu0 0.0
    %229 = vmatpush1.msra.mxu0 0.0
    %230 = vmatprep.subr.mxu0 0.0
    %231 = vmatpush1.msra.mxu0 0.0
    %232 = vmatprep.subr.mxu0 0.0
    %233 = vmatpush1.msra.mxu0 0.0
    %234 = vmatprep.subr.mxu0 0.0
    %235 = vmatpush1.msra.mxu0 0.0
    %236 = vmatprep.subr.mxu0 0.0
    %237 = vmatpush1.msra.mxu0 0.0
    %238 = vmatprep.subr.mxu0 0.0
    %239 = vmatpush1.msra.mxu0 0.0
    %240 = vmatprep.subr.mxu0 0.0
    %241 = vmatpush1.msra.mxu0 0.0
    %242 = vmatprep.subr.mxu0 0.0
    %243 = vmatpush1.msra.mxu0 0.0
    %244 = vmatprep.subr.mxu0 0.0
    %245 = vmatpush1.msra.mxu0 0.0
    %246 = vmatprep.subr.mxu0 0.0
    %247 = vmatpush1.msra.mxu0 0.0
    %248 = vmatprep.subr.mxu0 0.0
    %249 = vmatpush1.msra.mxu0 0.0
    %250 = vmatprep.subr.mxu0 0.0
    %251 = vmatpush1.msra.mxu0 0.0
    %252 = vmatprep.subr.mxu0 0.0
    %253 = vmatpush1.msra.mxu0 0.0
    %254 = vmatprep.subr.mxu0 0.0
    %255 = vmatpush1.msra.mxu0 0.0
    %256 = vmatprep.subr.mxu0 0.0
    %257 = vmatpush1.msra.mxu0 0.0
    %258 = vmatprep.subr.mxu0 0.0
    %259 = vmatpush1.msra.mxu0 0.0
    %260 = vmatprep.subr.mxu0 0.0
    %261 = vmatpush1.msra.mxu0 0.0
    %262 = vmatprep.subr.mxu0 0.0
    %263 = vmatpush1.msra.mxu0 0.0
    %264 = vmatprep.subr.mxu0 0.0
    %265 = vmatpush1.msra.mxu0 0.0
    %266 = vmatprep.subr.mxu0 0.0
    %267 = vmatpush1.msra.mxu0 0.0
    %268 = vmatprep.subr.mxu0 0.0
    %269 = vmatpush1.msra.mxu0 0.0
    %270 = vmatprep.subr.mxu0 0.0
    %271 = vmatpush1.msra.mxu0 0.0
    %272 = vmatprep.subr.mxu0 0.0
    %273 = vmatpush1.msra.mxu0 0.0
    %274 = vmatprep.subr.mxu0 0.0
    %275 = vmatpush1.msra.mxu0 0.0
    %276 = vmatprep.subr.mxu0 0.0
    %277 = vmatpush1.msra.mxu0 0.0
    %278 = vmatprep.mubr.f32.mxu0 0.0
    %279 = vmatmul.mubr.f32.gmra.mrb[0].mxu0 %v141
    %v280 = vpop.f32.mrb[0].mxu0
    %v281 = vadd.f32 %v130, %v280
    %v282 = vpop.f32.mrb[0].mxu0
    %v283 = vadd.f32 %v134, %v282
    %284 = vdwg.mxu0
    %v285 = vxor.u32 %v210, 2147483648
    %v286 = vmul.f32 %v285, 1.442695
    %v287 = vpow.pop %v286
    %v288 = vadd.f32 %v287, 1.0
    %v289 = vrcp.pop %v288
    %v290 = vmul.f32 1.0, %v289
    %v291 = vtanh.pop %v281
    %v292 = vxor.u32 %v283, 2147483648
    %v293 = vmul.f32 %v292, 1.442695
    %v294 = vpow.pop %v293
    %v295 = vadd.f32 %v294, 1.0
    %v296 = vrcp.pop %v295
    %v297 = vmul.f32 1.0, %v296
    %v298 = vmul.f32 %v290, %v291
    %v299 = vtanh.pop %v298
    %v300 = vmul.f32 %v297, %v299
    %301 = vmatprep.subr.mxu0 %v45
    %302 = vmatpush1.msra.mxu0 %v44
    %303 = vmatprep.subr.mxu0 %v49
    %304 = vmatpush1.msra.mxu0 %v48
    %305 = vmatprep.subr.mxu0 %v53
    %306 = vmatpush1.msra.mxu0 %v52
    %307 = vmatprep.subr.mxu0 %v57
    %308 = vmatpush1.msra.mxu0 %v56
    %309 = vmatprep.subr.mxu0 %v61
    %310 = vmatpush1.msra.mxu0 %v60
    %311 = vmatprep.subr.mxu0 %v65
    %312 = vmatpush1.msra.mxu0 %v64
    %313 = vmatprep.subr.mxu0 %v69
    %314 = vmatpush1.msra.mxu0 %v68
    %315 = vmatprep.subr.mxu0 %v73
    %316 = vmatpush1.msra.mxu0 %v72
    %317 = vmatprep.subr.mxu0 %v77
    %318 = vmatpush1.msra.mxu0 %v76
    %319 = vmatprep.subr.mxu0 %v81
    %320 = vmatpush1.msra.mxu0 %v80
    %321 = vmatprep.subr.mxu0 %v85
    %322 = vmatpush1.msra.mxu0 %v84
    %323 = vmatprep.subr.mxu0 %v89
    %324 = vmatpush1.msra.mxu0 %v88
    %325 = vmatprep.subr.mxu0 %v93
    %326 = vmatpush1.msra.mxu0 %v92
    %327 = vmatprep.subr.mxu0 %v97
    %328 = vmatpush1.msra.mxu0 %v96
    %329 = vmatprep.subr.mxu0 %v101
    %330 = vmatpush1.msra.mxu0 %v100
    %331 = vmatprep.subr.mxu0 %v105
    %332 = vmatpush1.msra.mxu0 %v104
    %333 = vmatprep.subr.mxu0 0.0
    %334 = vmatpush1.msra.mxu0 0.0
    %335 = vmatprep.subr.mxu0 0.0
    %336 = vmatpush1.msra.mxu0 0.0
    %337 = vmatprep.subr.mxu0 0.0
    %338 = vmatpush1.msra.mxu0 0.0
    %339 = vmatprep.subr.mxu0 0.0
    %340 = vmatpush1.msra.mxu0 0.0
    %341 = vmatprep.subr.mxu0 0.0
    %342 = vmatpush1.msra.mxu0 0.0
    %343 = vmatprep.subr.mxu0 0.0
    %344 = vmatpush1.msra.mxu0 0.0
    %345 = vmatprep.subr.mxu0 0.0
    %346 = vmatpush1.msra.mxu0 0.0
    %347 = vmatprep.subr.mxu0 0.0
    %348 = vmatpush1.msra.mxu0 0.0
    %349 = vmatprep.subr.mxu0 0.0
    %350 = vmatpush1.msra.mxu0 0.0
    %351 = vmatprep.subr.mxu0 0.0
    %352 = vmatpush1.msra.mxu0 0.0
    %353 = vmatprep.subr.mxu0 0.0
    %354 = vmatpush1.msra.mxu0 0.0
    %355 = vmatprep.subr.mxu0 0.0
    %356 = vmatpush1.msra.mxu0 0.0
    %357 = vmatprep.subr.mxu0 0.0
    %358 = vmatpush1.msra.mxu0 0.0
    %359 = vmatprep.subr.mxu0 0.0
    %360 = vmatpush1.msra.mxu0 0.0
    %361 = vmatprep.subr.mxu0 0.0
    %362 = vmatpush1.msra.mxu0 0.0
    %363 = vmatprep.subr.mxu0 0.0
    %364 = vmatpush1.msra.mxu0 0.0
    %365 = vmatprep.mubr.f32.mxu0 0.0
    %366 = vmatmul.mubr.f32.gmra.mrb[0].mxu0 %v300
    %v367 = vpop.f32.mrb[0].mxu0
    %v368 = vadd.f32 0.0, %v367
    %v369 = vpop.f32.mrb[0].mxu0
    %v370 = vadd.f32 0.0, %v369
    %371 = vdwg.mxu0
    %372 = vmatprep.subr.mxu0 %v47
    %373 = vmatpush1.msra.mxu0 %v46
    %374 = vmatprep.subr.mxu0 %v51
    %375 = vmatpush1.msra.mxu0 %v50
    %376 = vmatprep.subr.mxu0 %v55
    %377 = vmatpush1.msra.mxu0 %v54
    %378 = vmatprep.subr.mxu0 %v59
    %379 = vmatpush1.msra.mxu0 %v58
    %380 = vmatprep.subr.mxu0 %v63
    %381 = vmatpush1.msra.mxu0 %v62
    %382 = vmatprep.subr.mxu0 %v67
    %383 = vmatpush1.msra.mxu0 %v66
    %384 = vmatprep.subr.mxu0 %v71
    %385 = vmatpush1.msra.mxu0 %v70
    %386 = vmatprep.subr.mxu0 %v75
    %387 = vmatpush1.msra.mxu0 %v74
    %388 = vmatprep.subr.mxu0 %v79
    %389 = vmatpush1.msra.mxu0 %v78
    %390 = vmatprep.subr.mxu0 %v83
    %391 = vmatpush1.msra.mxu0 %v82
    %392 = vmatprep.subr.mxu0 %v87
    %393 = vmatpush1.msra.mxu0 %v86
    %394 = vmatprep.subr.mxu0 %v91
    %395 = vmatpush1.msra.mxu0 %v90
    %396 = vmatprep.subr.mxu0 %v95
    %397 = vmatpush1.msra.mxu0 %v94
    %398 = vmatprep.subr.mxu0 %v99
    %399 = vmatpush1.msra.mxu0 %v98
    %400 = vmatprep.subr.mxu0 %v103
    %401 = vmatpush1.msra.mxu0 %v102
    %402 = vmatprep.subr.mxu0 %v107
    %403 = vmatpush1.msra.mxu0 %v106
    %404 = vmatprep.subr.mxu0 0.0
    %405 = vmatpush1.msra.mxu0 0.0
    %406 = vmatprep.subr.mxu0 0.0
    %407 = vmatpush1.msra.mxu0 0.0
    %408 = vmatprep.subr.mxu0 0.0
    %409 = vmatpush1.msra.mxu0 0.0
    %410 = vmatprep.subr.mxu0 0.0
    %411 = vmatpush1.msra.mxu0 0.0
    %412 = vmatprep.subr.mxu0 0.0
    %413 = vmatpush1.msra.mxu0 0.0
    %414 = vmatprep.subr.mxu0 0.0
    %415 = vmatpush1.msra.mxu0 0.0
    %416 = vmatprep.subr.mxu0 0.0
    %417 = vmatpush1.msra.mxu0 0.0
    %418 = vmatprep.subr.mxu0 0.0
    %419 = vmatpush1.msra.mxu0 0.0
    %420 = vmatprep.subr.mxu0 0.0
    %421 = vmatpush1.msra.mxu0 0.0
    %422 = vmatprep.subr.mxu0 0.0
    %423 = vmatpush1.msra.mxu0 0.0
    %424 = vmatprep.subr.mxu0 0.0
    %425 = vmatpush1.msra.mxu0 0.0
    %426 = vmatprep.subr.mxu0 0.0
    %427 = vmatpush1.msra.mxu0 0.0
    %428 = vmatprep.subr.mxu0 0.0
    %429 = vmatpush1.msra.mxu0 0.0
    %430 = vmatprep.subr.mxu0 0.0
    %431 = vmatpush1.msra.mxu0 0.0
    %432 = vmatprep.subr.mxu0 0.0
    %433 = vmatpush1.msra.mxu0 0.0
    %434 = vmatprep.subr.mxu0 0.0
    %435 = vmatpush1.msra.mxu0 0.0
    %436 = vmatprep.mubr.f32.mxu0 0.0
    %437 = vmatmul.mubr.f32.gmra.mrb[0].mxu0 %v300
    %v438 = vpop.f32.mrb[0].mxu0
    %v439 = vadd.f32 0.0, %v438
    %v440 = vpop.f32.mrb[0].mxu0
    %v441 = vadd.f32 0.0, %v440
    %442 = vdwg.mxu0
    %v447 = vrot.slane %v368, 7
    %v448 = vrot.slane %v370, 7
    %v449 = vrot.slane %v439, 7
    %v450 = vrot.slane %v441, 7
    %v455 = vadd.f32 %v210, %v447
    %v456 = vadd.f32 %v212, %v448
    %v457 = vadd.f32 %v281, %v449
    %v458 = vadd.f32 %v283, %v450
    %v459 = vxor.u32 %v455, 2147483648
    %v460 = vmul.f32 %v459, 1.442695
    %v461 = vpow.pop %v460
    %v462 = vadd.f32 %v461, 1.0
    %v463 = vrcp.pop %v462
    %v464 = vmul.f32 1.0, %v463
    %v465 = vxor.u32 %v456, 2147483648
    %v466 = vmul.f32 %v465, 1.442695
    %v467 = vpow.pop %v466
    %v468 = vadd.f32 %v467, 1.0
    %v469 = vrcp.pop %v468
    %v470 = vmul.f32 1.0, %v469
    %v471 = vtanh.pop %v457
    %v472 = vxor.u32 %v458, 2147483648
    %v473 = vmul.f32 %v472, 1.442695
    %v474 = vpow.pop %v473
    %v475 = vadd.f32 %v474, 1.0
    %v476 = vrcp.pop %v475
    %v477 = vmul.f32 1.0, %v476
    %v479 = vrot.slane %v298, 7
    %v481 = vmul.f32 %v470, %v479
    %v482 = vmul.f32 %v464, %v471
    %v483 = vadd.f32 %v481, %v482
    %v484 = vtanh.pop %v483
    %v485 = vmul.f32 %v477, %v484
    %v487 = vrot.slane %v485, 1
    %489 = vmatprep.subr.mxu0 %v45
    %490 = vmatpush1.msra.mxu0 %v44
    %491 = vmatprep.subr.mxu0 %v49
    %492 = vmatpush1.msra.mxu0 %v48
    %493 = vmatprep.subr.mxu0 %v53
    %494 = vmatpush1.msra.mxu0 %v52
    %495 = vmatprep.subr.mxu0 %v57
    %496 = vmatpush1.msra.mxu0 %v56
    %497 = vmatprep.subr.mxu0 %v61
    %498 = vmatpush1.msra.mxu0 %v60
    %499 = vmatprep.subr.mxu0 %v65
    %500 = vmatpush1.msra.mxu0 %v64
    %501 = vmatprep.subr.mxu0 %v69
    %502 = vmatpush1.msra.mxu0 %v68
    %503 = vmatprep.subr.mxu0 %v73
    %504 = vmatpush1.msra.mxu0 %v72
    %505 = vmatprep.subr.mxu0 %v77
    %506 = vmatpush1.msra.mxu0 %v76
    %507 = vmatprep.subr.mxu0 %v81
    %508 = vmatpush1.msra.mxu0 %v80
    %509 = vmatprep.subr.mxu0 %v85
    %510 = vmatpush1.msra.mxu0 %v84
    %511 = vmatprep.subr.mxu0 %v89
    %512 = vmatpush1.msra.mxu0 %v88
    %513 = vmatprep.subr.mxu0 %v93
    %514 = vmatpush1.msra.mxu0 %v92
    %515 = vmatprep.subr.mxu0 %v97
    %516 = vmatpush1.msra.mxu0 %v96
    %517 = vmatprep.subr.mxu0 %v101
    %518 = vmatpush1.msra.mxu0 %v100
    %519 = vmatprep.subr.mxu0 %v105
    %520 = vmatpush1.msra.mxu0 %v104
    %521 = vmatprep.subr.mxu0 0.0
    %522 = vmatpush1.msra.mxu0 0.0
    %523 = vmatprep.subr.mxu0 0.0
    %524 = vmatpush1.msra.mxu0 0.0
    %525 = vmatprep.subr.mxu0 0.0
    %526 = vmatpush1.msra.mxu0 0.0
    %527 = vmatprep.subr.mxu0 0.0
    %528 = vmatpush1.msra.mxu0 0.0
    %529 = vmatprep.subr.mxu0 0.0
    %530 = vmatpush1.msra.mxu0 0.0
    %531 = vmatprep.subr.mxu0 0.0
    %532 = vmatpush1.msra.mxu0 0.0
    %533 = vmatprep.subr.mxu0 0.0
    %534 = vmatpush1.msra.mxu0 0.0
    %535 = vmatprep.subr.mxu0 0.0
    %536 = vmatpush1.msra.mxu0 0.0
    %537 = vmatprep.subr.mxu0 0.0
    %538 = vmatpush1.msra.mxu0 0.0
    %539 = vmatprep.subr.mxu0 0.0
    %540 = vmatpush1.msra.mxu0 0.0
    %541 = vmatprep.subr.mxu0 0.0
    %542 = vmatpush1.msra.mxu0 0.0
    %543 = vmatprep.subr.mxu0 0.0
    %544 = vmatpush1.msra.mxu0 0.0
    %545 = vmatprep.subr.mxu0 0.0
    %546 = vmatpush1.msra.mxu0 0.0
    %547 = vmatprep.subr.mxu0 0.0
    %548 = vmatpush1.msra.mxu0 0.0
    %549 = vmatprep.subr.mxu0 0.0
    %550 = vmatpush1.msra.mxu0 0.0
    %551 = vmatprep.subr.mxu0 0.0
    %552 = vmatpush1.msra.mxu0 0.0
    %553 = vmatprep.mubr.f32.mxu0 0.0
    %554 = vmatmul.mubr.f32.gmra.mrb[0].mxu0 %v487
    %v555 = vpop.f32.mrb[0].mxu0
    %v556 = vadd.f32 0.0, %v555
    %v557 = vpop.f32.mrb[0].mxu0
    %v558 = vadd.f32 0.0, %v557
    %559 = vdwg.mxu0
    %560 = vmatprep.subr.mxu0 %v47
    %561 = vmatpush1.msra.mxu0 %v46
    %562 = vmatprep.subr.mxu0 %v51
    %563 = vmatpush1.msra.mxu0 %v50
    %564 = vmatprep.subr.mxu0 %v55
    %565 = vmatpush1.msra.mxu0 %v54
    %566 = vmatprep.subr.mxu0 %v59
    %567 = vmatpush1.msra.mxu0 %v58
    %568 = vmatprep.subr.mxu0 %v63
    %569 = vmatpush1.msra.mxu0 %v62
    %570 = vmatprep.subr.mxu0 %v67
    %571 = vmatpush1.msra.mxu0 %v66
    %572 = vmatprep.subr.mxu0 %v71
    %573 = vmatpush1.msra.mxu0 %v70
    %574 = vmatprep.subr.mxu0 %v75
    %575 = vmatpush1.msra.mxu0 %v74
    %576 = vmatprep.subr.mxu0 %v79
    %577 = vmatpush1.msra.mxu0 %v78
    %578 = vmatprep.subr.mxu0 %v83
    %579 = vmatpush1.msra.mxu0 %v82
    %580 = vmatprep.subr.mxu0 %v87
    %581 = vmatpush1.msra.mxu0 %v86
    %582 = vmatprep.subr.mxu0 %v91
    %583 = vmatpush1.msra.mxu0 %v90
    %584 = vmatprep.subr.mxu0 %v95
    %585 = vmatpush1.msra.mxu0 %v94
    %586 = vmatprep.subr.mxu0 %v99
    %587 = vmatpush1.msra.mxu0 %v98
    %588 = vmatprep.subr.mxu0 %v103
    %589 = vmatpush1.msra.mxu0 %v102
    %590 = vmatprep.subr.mxu0 %v107
    %591 = vmatpush1.msra.mxu0 %v106
    %592 = vmatprep.subr.mxu0 0.0
    %593 = vmatpush1.msra.mxu0 0.0
    %594 = vmatprep.subr.mxu0 0.0
    %595 = vmatpush1.msra.mxu0 0.0
    %596 = vmatprep.subr.mxu0 0.0
    %597 = vmatpush1.msra.mxu0 0.0
    %598 = vmatprep.subr.mxu0 0.0
    %599 = vmatpush1.msra.mxu0 0.0
    %600 = vmatprep.subr.mxu0 0.0
    %601 = vmatpush1.msra.mxu0 0.0
    %602 = vmatprep.subr.mxu0 0.0
    %603 = vmatpush1.msra.mxu0 0.0
    %604 = vmatprep.subr.mxu0 0.0
    %605 = vmatpush1.msra.mxu0 0.0
    %606 = vmatprep.subr.mxu0 0.0
    %607 = vmatpush1.msra.mxu0 0.0
    %608 = vmatprep.subr.mxu0 0.0
    %609 = vmatpush1.msra.mxu0 0.0
    %610 = vmatprep.subr.mxu0 0.0
    %611 = vmatpush1.msra.mxu0 0.0
    %612 = vmatprep.subr.mxu0 0.0
    %613 = vmatpush1.msra.mxu0 0.0
    %614 = vmatprep.subr.mxu0 0.0
    %615 = vmatpush1.msra.mxu0 0.0
    %616 = vmatprep.subr.mxu0 0.0
    %617 = vmatpush1.msra.mxu0 0.0
    %618 = vmatprep.subr.mxu0 0.0
    %619 = vmatpush1.msra.mxu0 0.0
    %620 = vmatprep.subr.mxu0 0.0
    %621 = vmatpush1.msra.mxu0 0.0
    %622 = vmatprep.subr.mxu0 0.0
    %623 = vmatpush1.msra.mxu0 0.0
    %624 = vmatprep.mubr.f32.mxu0 0.0
    %625 = vmatmul.mubr.f32.gmra.mrb[0].mxu0 %v487
    %v626 = vpop.f32.mrb[0].mxu0
    %v627 = vadd.f32 0.0, %v626
    %v628 = vpop.f32.mrb[0].mxu0
    %v629 = vadd.f32 0.0, %v628
    %630 = vdwg.mxu0
    %v635 = vrot.slane %v556, 6
    %v636 = vrot.slane %v558, 6
    %v637 = vrot.slane %v627, 6
    %v638 = vrot.slane %v629, 6
    %v643 = vadd.f32 %v210, %v635
    %v644 = vadd.f32 %v212, %v636
    %v645 = vadd.f32 %v281, %v637
    %v646 = vadd.f32 %v283, %v638
    %v647 = vxor.u32 %v643, 2147483648
    %v648 = vmul.f32 %v647, 1.442695
    %v649 = vpow.pop %v648
    %v650 = vadd.f32 %v649, 1.0
    %v651 = vrcp.pop %v650
    %v652 = vmul.f32 1.0, %v651
    %v653 = vxor.u32 %v644, 2147483648
    %v654 = vmul.f32 %v653, 1.442695
    %v655 = vpow.pop %v654
    %v656 = vadd.f32 %v655, 1.0
    %v657 = vrcp.pop %v656
    %v658 = vmul.f32 1.0, %v657
    %v659 = vtanh.pop %v645
    %v660 = vxor.u32 %v646, 2147483648
    %v661 = vmul.f32 %v660, 1.442695
    %v662 = vpow.pop %v661
    %v663 = vadd.f32 %v662, 1.0
    %v664 = vrcp.pop %v663
    %v665 = vmul.f32 1.0, %v664
    %v667 = vrot.slane %v483, 7
    %v669 = vmul.f32 %v658, %v667
    %v670 = vmul.f32 %v652, %v659
    %v671 = vadd.f32 %v669, %v670
    %v672 = vtanh.pop %v671
    %v673 = vmul.f32 %v665, %v672
    %v675 = vrot.slane %v673, 2
    %677 = vmatprep.subr.mxu0 %v45
    %678 = vmatpush1.msra.mxu0 %v44
    %679 = vmatprep.subr.mxu0 %v49
    %680 = vmatpush1.msra.mxu0 %v48
    %681 = vmatprep.subr.mxu0 %v53
    %682 = vmatpush1.msra.mxu0 %v52
    %683 = vmatprep.subr.mxu0 %v57
    %684 = vmatpush1.msra.mxu0 %v56
    %685 = vmatprep.subr.mxu0 %v61
    %686 = vmatpush1.msra.mxu0 %v60
    %687 = vmatprep.subr.mxu0 %v65
    %688 = vmatpush1.msra.mxu0 %v64
    %689 = vmatprep.subr.mxu0 %v69
    %690 = vmatpush1.msra.mxu0 %v68
    %691 = vmatprep.subr.mxu0 %v73
    %692 = vmatpush1.msra.mxu0 %v72
    %693 = vmatprep.subr.mxu0 %v77
    %694 = vmatpush1.msra.mxu0 %v76
    %695 = vmatprep.subr.mxu0 %v81
    %696 = vmatpush1.msra.mxu0 %v80
    %697 = vmatprep.subr.mxu0 %v85
    %698 = vmatpush1.msra.mxu0 %v84
    %699 = vmatprep.subr.mxu0 %v89
    %700 = vmatpush1.msra.mxu0 %v88
    %701 = vmatprep.subr.mxu0 %v93
    %702 = vmatpush1.msra.mxu0 %v92
    %703 = vmatprep.subr.mxu0 %v97
    %704 = vmatpush1.msra.mxu0 %v96
    %705 = vmatprep.subr.mxu0 %v101
    %706 = vmatpush1.msra.mxu0 %v100
    %707 = vmatprep.subr.mxu0 %v105
    %708 = vmatpush1.msra.mxu0 %v104
    %709 = vmatprep.subr.mxu0 0.0
    %710 = vmatpush1.msra.mxu0 0.0
    %711 = vmatprep.subr.mxu0 0.0
    %712 = vmatpush1.msra.mxu0 0.0
    %713 = vmatprep.subr.mxu0 0.0
    %714 = vmatpush1.msra.mxu0 0.0
    %715 = vmatprep.subr.mxu0 0.0
    %716 = vmatpush1.msra.mxu0 0.0
    %717 = vmatprep.subr.mxu0 0.0
    %718 = vmatpush1.msra.mxu0 0.0
    %719 = vmatprep.subr.mxu0 0.0
    %720 = vmatpush1.msra.mxu0 0.0
    %721 = vmatprep.subr.mxu0 0.0
    %722 = vmatpush1.msra.mxu0 0.0
    %723 = vmatprep.subr.mxu0 0.0
    %724 = vmatpush1.msra.mxu0 0.0
    %725 = vmatprep.subr.mxu0 0.0
    %726 = vmatpush1.msra.mxu0 0.0
    %727 = vmatprep.subr.mxu0 0.0
    %728 = vmatpush1.msra.mxu0 0.0
    %729 = vmatprep.subr.mxu0 0.0
    %730 = vmatpush1.msra.mxu0 0.0
    %731 = vmatprep.subr.mxu0 0.0
    %732 = vmatpush1.msra.mxu0 0.0
    %733 = vmatprep.subr.mxu0 0.0
    %734 = vmatpush1.msra.mxu0 0.0
    %735 = vmatprep.subr.mxu0 0.0
    %736 = vmatpush1.msra.mxu0 0.0
    %737 = vmatprep.subr.mxu0 0.0
    %738 = vmatpush1.msra.mxu0 0.0
    %739 = vmatprep.subr.mxu0 0.0
    %740 = vmatpush1.msra.mxu0 0.0
    %741 = vmatprep.mubr.f32.mxu0 0.0
    %742 = vmatmul.mubr.f32.gmra.mrb[0].mxu0 %v675
    %v743 = vpop.f32.mrb[0].mxu0
    %v744 = vadd.f32 0.0, %v743
    %v745 = vpop.f32.mrb[0].mxu0
    %v746 = vadd.f32 0.0, %v745
    %747 = vdwg.mxu0
    %748 = vmatprep.subr.mxu0 %v47
    %749 = vmatpush1.msra.mxu0 %v46
    %750 = vmatprep.subr.mxu0 %v51
    %751 = vmatpush1.msra.mxu0 %v50
    %752 = vmatprep.subr.mxu0 %v55
    %753 = vmatpush1.msra.mxu0 %v54
    %754 = vmatprep.subr.mxu0 %v59
    %755 = vmatpush1.msra.mxu0 %v58
    %756 = vmatprep.subr.mxu0 %v63
    %757 = vmatpush1.msra.mxu0 %v62
    %758 = vmatprep.subr.mxu0 %v67
    %759 = vmatpush1.msra.mxu0 %v66
    %760 = vmatprep.subr.mxu0 %v71
    %761 = vmatpush1.msra.mxu0 %v70
    %762 = vmatprep.subr.mxu0 %v75
    %763 = vmatpush1.msra.mxu0 %v74
    %764 = vmatprep.subr.mxu0 %v79
    %765 = vmatpush1.msra.mxu0 %v78
    %766 = vmatprep.subr.mxu0 %v83
    %767 = vmatpush1.msra.mxu0 %v82
    %768 = vmatprep.subr.mxu0 %v87
    %769 = vmatpush1.msra.mxu0 %v86
    %770 = vmatprep.subr.mxu0 %v91
    %771 = vmatpush1.msra.mxu0 %v90
    %772 = vmatprep.subr.mxu0 %v95
    %773 = vmatpush1.msra.mxu0 %v94
    %774 = vmatprep.subr.mxu0 %v99
    %775 = vmatpush1.msra.mxu0 %v98
    %776 = vmatprep.subr.mxu0 %v103
    %777 = vmatpush1.msra.mxu0 %v102
    %778 = vmatprep.subr.mxu0 %v107
    %779 = vmatpush1.msra.mxu0 %v106
    %780 = vmatprep.subr.mxu0 0.0
    %781 = vmatpush1.msra.mxu0 0.0
    %782 = vmatprep.subr.mxu0 0.0
    %783 = vmatpush1.msra.mxu0 0.0
    %784 = vmatprep.subr.mxu0 0.0
    %785 = vmatpush1.msra.mxu0 0.0
    %786 = vmatprep.subr.mxu0 0.0
    %787 = vmatpush1.msra.mxu0 0.0
    %788 = vmatprep.subr.mxu0 0.0
    %789 = vmatpush1.msra.mxu0 0.0
    %790 = vmatprep.subr.mxu0 0.0
    %791 = vmatpush1.msra.mxu0 0.0
    %792 = vmatprep.subr.mxu0 0.0
    %793 = vmatpush1.msra.mxu0 0.0
    %794 = vmatprep.subr.mxu0 0.0
    %795 = vmatpush1.msra.mxu0 0.0
    %796 = vmatprep.subr.mxu0 0.0
    %797 = vmatpush1.msra.mxu0 0.0
    %798 = vmatprep.subr.mxu0 0.0
    %799 = vmatpush1.msra.mxu0 0.0
    %800 = vmatprep.subr.mxu0 0.0
    %801 = vmatpush1.msra.mxu0 0.0
    %802 = vmatprep.subr.mxu0 0.0
    %803 = vmatpush1.msra.mxu0 0.0
    %804 = vmatprep.subr.mxu0 0.0
    %805 = vmatpush1.msra.mxu0 0.0
    %806 = vmatprep.subr.mxu0 0.0
    %807 = vmatpush1.msra.mxu0 0.0
    %808 = vmatprep.subr.mxu0 0.0
    %809 = vmatpush1.msra.mxu0 0.0
    %810 = vmatprep.subr.mxu0 0.0
    %811 = vmatpush1.msra.mxu0 0.0
    %812 = vmatprep.mubr.f32.mxu0 0.0
    %813 = vmatmul.mubr.f32.gmra.mrb[0].mxu0 %v675
    %v814 = vpop.f32.mrb[0].mxu0
    %v815 = vadd.f32 0.0, %v814
    %v816 = vpop.f32.mrb[0].mxu0
    %v817 = vadd.f32 0.0, %v816
    %818 = vdwg.mxu0
    %v823 = vrot.slane %v744, 5
    %v824 = vrot.slane %v746, 5
    %v825 = vrot.slane %v815, 5
    %v826 = vrot.slane %v817, 5
    %v831 = vadd.f32 %v210, %v823
    %v832 = vadd.f32 %v212, %v824
    %v833 = vadd.f32 %v281, %v825
    %v834 = vadd.f32 %v283, %v826
    %v835 = vxor.u32 %v831, 2147483648
    %v836 = vmul.f32 %v835, 1.442695
    %v837 = vpow.pop %v836
    %v838 = vadd.f32 %v837, 1.0
    %v839 = vrcp.pop %v838
    %v840 = vmul.f32 1.0, %v839
    %v841 = vxor.u32 %v832, 2147483648
    %v842 = vmul.f32 %v841, 1.442695
    %v843 = vpow.pop %v842
    %v844 = vadd.f32 %v843, 1.0
    %v845 = vrcp.pop %v844
    %v846 = vmul.f32 1.0, %v845
    %v847 = vtanh.pop %v833
    %v848 = vxor.u32 %v834, 2147483648
    %v849 = vmul.f32 %v848, 1.442695
    %v850 = vpow.pop %v849
    %v851 = vadd.f32 %v850, 1.0
    %v852 = vrcp.pop %v851
    %v853 = vmul.f32 1.0, %v852
    %v855 = vrot.slane %v671, 7
    %v857 = vmul.f32 %v846, %v855
    %v858 = vmul.f32 %v840, %v847
    %v859 = vadd.f32 %v857, %v858
    %v860 = vtanh.pop %v859
    %v861 = vmul.f32 %v853, %v860
    %v863 = vrot.slane %v861, 3
    %865 = vmatprep.subr.mxu0 %v45
    %866 = vmatpush1.msra.mxu0 %v44
    %867 = vmatprep.subr.mxu0 %v49
    %868 = vmatpush1.msra.mxu0 %v48
    %869 = vmatprep.subr.mxu0 %v53
    %870 = vmatpush1.msra.mxu0 %v52
    %871 = vmatprep.subr.mxu0 %v57
    %872 = vmatpush1.msra.mxu0 %v56
    %873 = vmatprep.subr.mxu0 %v61
    %874 = vmatpush1.msra.mxu0 %v60
    %875 = vmatprep.subr.mxu0 %v65
    %876 = vmatpush1.msra.mxu0 %v64
    %877 = vmatprep.subr.mxu0 %v69
    %878 = vmatpush1.msra.mxu0 %v68
    %879 = vmatprep.subr.mxu0 %v73
    %880 = vmatpush1.msra.mxu0 %v72
    %881 = vmatprep.subr.mxu0 %v77
    %882 = vmatpush1.msra.mxu0 %v76
    %883 = vmatprep.subr.mxu0 %v81
    %884 = vmatpush1.msra.mxu0 %v80
    %885 = vmatprep.subr.mxu0 %v85
    %886 = vmatpush1.msra.mxu0 %v84
    %887 = vmatprep.subr.mxu0 %v89
    %888 = vmatpush1.msra.mxu0 %v88
    %889 = vmatprep.subr.mxu0 %v93
    %890 = vmatpush1.msra.mxu0 %v92
    %891 = vmatprep.subr.mxu0 %v97
    %892 = vmatpush1.msra.mxu0 %v96
    %893 = vmatprep.subr.mxu0 %v101
    %894 = vmatpush1.msra.mxu0 %v100
    %895 = vmatprep.subr.mxu0 %v105
    %896 = vmatpush1.msra.mxu0 %v104
    %897 = vmatprep.subr.mxu0 0.0
    %898 = vmatpush1.msra.mxu0 0.0
    %899 = vmatprep.subr.mxu0 0.0
    %900 = vmatpush1.msra.mxu0 0.0
    %901 = vmatprep.subr.mxu0 0.0
    %902 = vmatpush1.msra.mxu0 0.0
    %903 = vmatprep.subr.mxu0 0.0
    %904 = vmatpush1.msra.mxu0 0.0
    %905 = vmatprep.subr.mxu0 0.0
    %906 = vmatpush1.msra.mxu0 0.0
    %907 = vmatprep.subr.mxu0 0.0
    %908 = vmatpush1.msra.mxu0 0.0
    %909 = vmatprep.subr.mxu0 0.0
    %910 = vmatpush1.msra.mxu0 0.0
    %911 = vmatprep.subr.mxu0 0.0
    %912 = vmatpush1.msra.mxu0 0.0
    %913 = vmatprep.subr.mxu0 0.0
    %914 = vmatpush1.msra.mxu0 0.0
    %915 = vmatprep.subr.mxu0 0.0
    %916 = vmatpush1.msra.mxu0 0.0
    %917 = vmatprep.subr.mxu0 0.0
    %918 = vmatpush1.msra.mxu0 0.0
    %919 = vmatprep.subr.mxu0 0.0
    %920 = vmatpush1.msra.mxu0 0.0
    %921 = vmatprep.subr.mxu0 0.0
    %922 = vmatpush1.msra.mxu0 0.0
    %923 = vmatprep.subr.mxu0 0.0
    %924 = vmatpush1.msra.mxu0 0.0
    %925 = vmatprep.subr.mxu0 0.0
    %926 = vmatpush1.msra.mxu0 0.0
    %927 = vmatprep.subr.mxu0 0.0
    %928 = vmatpush1.msra.mxu0 0.0
    %929 = vmatprep.mubr.f32.mxu0 0.0
    %930 = vmatmul.mubr.f32.gmra.mrb[0].mxu0 %v863
    %v931 = vpop.f32.mrb[0].mxu0
    %v932 = vadd.f32 0.0, %v931
    %v933 = vpop.f32.mrb[0].mxu0
    %v934 = vadd.f32 0.0, %v933
    %935 = vdwg.mxu0
    %936 = vmatprep.subr.mxu0 %v47
    %937 = vmatpush1.msra.mxu0 %v46
    %938 = vmatprep.subr.mxu0 %v51
    %939 = vmatpush1.msra.mxu0 %v50
    %940 = vmatprep.subr.mxu0 %v55
    %941 = vmatpush1.msra.mxu0 %v54
    %942 = vmatprep.subr.mxu0 %v59
    %943 = vmatpush1.msra.mxu0 %v58
    %944 = vmatprep.subr.mxu0 %v63
    %945 = vmatpush1.msra.mxu0 %v62
    %946 = vmatprep.subr.mxu0 %v67
    %947 = vmatpush1.msra.mxu0 %v66
    %948 = vmatprep.subr.mxu0 %v71
    %949 = vmatpush1.msra.mxu0 %v70
    %950 = vmatprep.subr.mxu0 %v75
    %951 = vmatpush1.msra.mxu0 %v74
    %952 = vmatprep.subr.mxu0 %v79
    %953 = vmatpush1.msra.mxu0 %v78
    %954 = vmatprep.subr.mxu0 %v83
    %955 = vmatpush1.msra.mxu0 %v82
    %956 = vmatprep.subr.mxu0 %v87
    %957 = vmatpush1.msra.mxu0 %v86
    %958 = vmatprep.subr.mxu0 %v91
    %959 = vmatpush1.msra.mxu0 %v90
    %960 = vmatprep.subr.mxu0 %v95
    %961 = vmatpush1.msra.mxu0 %v94
    %962 = vmatprep.subr.mxu0 %v99
    %963 = vmatpush1.msra.mxu0 %v98
    %964 = vmatprep.subr.mxu0 %v103
    %965 = vmatpush1.msra.mxu0 %v102
    %966 = vmatprep.subr.mxu0 %v107
    %967 = vmatpush1.msra.mxu0 %v106
    %968 = vmatprep.subr.mxu0 0.0
    %969 = vmatpush1.msra.mxu0 0.0
    %970 = vmatprep.subr.mxu0 0.0
    %971 = vmatpush1.msra.mxu0 0.0
    %972 = vmatprep.subr.mxu0 0.0
    %973 = vmatpush1.msra.mxu0 0.0
    %974 = vmatprep.subr.mxu0 0.0
    %975 = vmatpush1.msra.mxu0 0.0
    %976 = vmatprep.subr.mxu0 0.0
    %977 = vmatpush1.msra.mxu0 0.0
    %978 = vmatprep.subr.mxu0 0.0
    %979 = vmatpush1.msra.mxu0 0.0
    %980 = vmatprep.subr.mxu0 0.0
    %981 = vmatpush1.msra.mxu0 0.0
    %982 = vmatprep.subr.mxu0 0.0
    %983 = vmatpush1.msra.mxu0 0.0
    %984 = vmatprep.subr.mxu0 0.0
    %985 = vmatpush1.msra.mxu0 0.0
    %986 = vmatprep.subr.mxu0 0.0
    %987 = vmatpush1.msra.mxu0 0.0
    %988 = vmatprep.subr.mxu0 0.0
    %989 = vmatpush1.msra.mxu0 0.0
    %990 = vmatprep.subr.mxu0 0.0
    %991 = vmatpush1.msra.mxu0 0.0
    %992 = vmatprep.subr.mxu0 0.0
    %993 = vmatpush1.msra.mxu0 0.0
    %994 = vmatprep.subr.mxu0 0.0
    %995 = vmatpush1.msra.mxu0 0.0
    %996 = vmatprep.subr.mxu0 0.0
    %997 = vmatpush1.msra.mxu0 0.0
    %998 = vmatprep.subr.mxu0 0.0
    %999 = vmatpush1.msra.mxu0 0.0
    %1000 = vmatprep.mubr.f32.mxu0 0.0
    %1001 = vmatmul.mubr.f32.gmra.mrb[0].mxu0 %v863
    %v1002 = vpop.f32.mrb[0].mxu0
    %v1003 = vadd.f32 0.0, %v1002
    %v1004 = vpop.f32.mrb[0].mxu0
    %v1005 = vadd.f32 0.0, %v1004
    %1006 = vdwg.mxu0
    %v1011 = vrot.slane %v932, 4
    %v1012 = vrot.slane %v934, 4
    %v1013 = vrot.slane %v1003, 4
    %v1014 = vrot.slane %v1005, 4
    %v1019 = vadd.f32 %v210, %v1011
    %v1020 = vadd.f32 %v212, %v1012
    %v1021 = vadd.f32 %v281, %v1013
    %v1022 = vadd.f32 %v283, %v1014
    %v1023 = vxor.u32 %v1019, 2147483648
    %v1024 = vmul.f32 %v1023, 1.442695
    %v1025 = vpow.pop %v1024
    %v1026 = vadd.f32 %v1025, 1.0
    %v1027 = vrcp.pop %v1026
    %v1028 = vmul.f32 1.0, %v1027
    %v1029 = vxor.u32 %v1020, 2147483648
    %v1030 = vmul.f32 %v1029, 1.442695
    %v1031 = vpow.pop %v1030
    %v1032 = vadd.f32 %v1031, 1.0
    %v1033 = vrcp.pop %v1032
    %v1034 = vmul.f32 1.0, %v1033
    %v1035 = vtanh.pop %v1021
    %v1036 = vxor.u32 %v1022, 2147483648
    %v1037 = vmul.f32 %v1036, 1.442695
    %v1038 = vpow.pop %v1037
    %v1039 = vadd.f32 %v1038, 1.0
    %v1040 = vrcp.pop %v1039
    %v1041 = vmul.f32 1.0, %v1040
    %v1043 = vrot.slane %v859, 7
    %v1045 = vmul.f32 %v1034, %v1043
    %v1046 = vmul.f32 %v1028, %v1035
    %v1047 = vadd.f32 %v1045, %v1046
    %v1048 = vtanh.pop %v1047
    %v1049 = vmul.f32 %v1041, %v1048
    %v1051 = vrot.slane %v1049, 4
    %1053 = vmatprep.subr.mxu0 %v45
    %1054 = vmatpush1.msra.mxu0 %v44
    %1055 = vmatprep.subr.mxu0 %v49
    %1056 = vmatpush1.msra.mxu0 %v48
    %1057 = vmatprep.subr.mxu0 %v53
    %1058 = vmatpush1.msra.mxu0 %v52
    %1059 = vmatprep.subr.mxu0 %v57
    %1060 = vmatpush1.msra.mxu0 %v56
    %1061 = vmatprep.subr.mxu0 %v61
    %1062 = vmatpush1.msra.mxu0 %v60
    %1063 = vmatprep.subr.mxu0 %v65
    %1064 = vmatpush1.msra.mxu0 %v64
    %1065 = vmatprep.subr.mxu0 %v69
    %1066 = vmatpush1.msra.mxu0 %v68
    %1067 = vmatprep.subr.mxu0 %v73
    %1068 = vmatpush1.msra.mxu0 %v72
    %1069 = vmatprep.subr.mxu0 %v77
    %1070 = vmatpush1.msra.mxu0 %v76
    %1071 = vmatprep.subr.mxu0 %v81
    %1072 = vmatpush1.msra.mxu0 %v80
    %1073 = vmatprep.subr.mxu0 %v85
    %1074 = vmatpush1.msra.mxu0 %v84
    %1075 = vmatprep.subr.mxu0 %v89
    %1076 = vmatpush1.msra.mxu0 %v88
    %1077 = vmatprep.subr.mxu0 %v93
    %1078 = vmatpush1.msra.mxu0 %v92
    %1079 = vmatprep.subr.mxu0 %v97
    %1080 = vmatpush1.msra.mxu0 %v96
    %1081 = vmatprep.subr.mxu0 %v101
    %1082 = vmatpush1.msra.mxu0 %v100
    %1083 = vmatprep.subr.mxu0 %v105
    %1084 = vmatpush1.msra.mxu0 %v104
    %1085 = vmatprep.subr.mxu0 0.0
    %1086 = vmatpush1.msra.mxu0 0.0
    %1087 = vmatprep.subr.mxu0 0.0
    %1088 = vmatpush1.msra.mxu0 0.0
    %1089 = vmatprep.subr.mxu0 0.0
    %1090 = vmatpush1.msra.mxu0 0.0
    %1091 = vmatprep.subr.mxu0 0.0
    %1092 = vmatpush1.msra.mxu0 0.0
    %1093 = vmatprep.subr.mxu0 0.0
    %1094 = vmatpush1.msra.mxu0 0.0
    %1095 = vmatprep.subr.mxu0 0.0
    %1096 = vmatpush1.msra.mxu0 0.0
    %1097 = vmatprep.subr.mxu0 0.0
    %1098 = vmatpush1.msra.mxu0 0.0
    %1099 = vmatprep.subr.mxu0 0.0
    %1100 = vmatpush1.msra.mxu0 0.0
    %1101 = vmatprep.subr.mxu0 0.0
    %1102 = vmatpush1.msra.mxu0 0.0
    %1103 = vmatprep.subr.mxu0 0.0
    %1104 = vmatpush1.msra.mxu0 0.0
    %1105 = vmatprep.subr.mxu0 0.0
    %1106 = vmatpush1.msra.mxu0 0.0
    %1107 = vmatprep.subr.mxu0 0.0
    %1108 = vmatpush1.msra.mxu0 0.0
    %1109 = vmatprep.subr.mxu0 0.0
    %1110 = vmatpush1.msra.mxu0 0.0
    %1111 = vmatprep.subr.mxu0 0.0
    %1112 = vmatpush1.msra.mxu0 0.0
    %1113 = vmatprep.subr.mxu0 0.0
    %1114 = vmatpush1.msra.mxu0 0.0
    %1115 = vmatprep.subr.mxu0 0.0
    %1116 = vmatpush1.msra.mxu0 0.0
    %1117 = vmatprep.mubr.f32.mxu0 0.0
    %1118 = vmatmul.mubr.f32.gmra.mrb[0].mxu0 %v1051
    %v1119 = vpop.f32.mrb[0].mxu0
    %v1120 = vadd.f32 0.0, %v1119
    %v1121 = vpop.f32.mrb[0].mxu0
    %v1122 = vadd.f32 0.0, %v1121
    %1123 = vdwg.mxu0
    %1124 = vmatprep.subr.mxu0 %v47
    %1125 = vmatpush1.msra.mxu0 %v46
    %1126 = vmatprep.subr.mxu0 %v51
    %1127 = vmatpush1.msra.mxu0 %v50
    %1128 = vmatprep.subr.mxu0 %v55
    %1129 = vmatpush1.msra.mxu0 %v54
    %1130 = vmatprep.subr.mxu0 %v59
    %1131 = vmatpush1.msra.mxu0 %v58
    %1132 = vmatprep.subr.mxu0 %v63
    %1133 = vmatpush1.msra.mxu0 %v62
    %1134 = vmatprep.subr.mxu0 %v67
    %1135 = vmatpush1.msra.mxu0 %v66
    %1136 = vmatprep.subr.mxu0 %v71
    %1137 = vmatpush1.msra.mxu0 %v70
    %1138 = vmatprep.subr.mxu0 %v75
    %1139 = vmatpush1.msra.mxu0 %v74
    %1140 = vmatprep.subr.mxu0 %v79
    %1141 = vmatpush1.msra.mxu0 %v78
    %1142 = vmatprep.subr.mxu0 %v83
    %1143 = vmatpush1.msra.mxu0 %v82
    %1144 = vmatprep.subr.mxu0 %v87
    %1145 = vmatpush1.msra.mxu0 %v86
    %1146 = vmatprep.subr.mxu0 %v91
    %1147 = vmatpush1.msra.mxu0 %v90
    %1148 = vmatprep.subr.mxu0 %v95
    %1149 = vmatpush1.msra.mxu0 %v94
    %1150 = vmatprep.subr.mxu0 %v99
    %1151 = vmatpush1.msra.mxu0 %v98
    %1152 = vmatprep.subr.mxu0 %v103
    %1153 = vmatpush1.msra.mxu0 %v102
    %1154 = vmatprep.subr.mxu0 %v107
    %1155 = vmatpush1.msra.mxu0 %v106
    %1156 = vmatprep.subr.mxu0 0.0
    %1157 = vmatpush1.msra.mxu0 0.0
    %1158 = vmatprep.subr.mxu0 0.0
    %1159 = vmatpush1.msra.mxu0 0.0
    %1160 = vmatprep.subr.mxu0 0.0
    %1161 = vmatpush1.msra.mxu0 0.0
    %1162 = vmatprep.subr.mxu0 0.0
    %1163 = vmatpush1.msra.mxu0 0.0
    %1164 = vmatprep.subr.mxu0 0.0
    %1165 = vmatpush1.msra.mxu0 0.0
    %1166 = vmatprep.subr.mxu0 0.0
    %1167 = vmatpush1.msra.mxu0 0.0
    %1168 = vmatprep.subr.mxu0 0.0
    %1169 = vmatpush1.msra.mxu0 0.0
    %1170 = vmatprep.subr.mxu0 0.0
    %1171 = vmatpush1.msra.mxu0 0.0
    %1172 = vmatprep.subr.mxu0 0.0
    %1173 = vmatpush1.msra.mxu0 0.0
    %1174 = vmatprep.subr.mxu0 0.0
    %1175 = vmatpush1.msra.mxu0 0.0
    %1176 = vmatprep.subr.mxu0 0.0
    %1177 = vmatpush1.msra.mxu0 0.0
    %1178 = vmatprep.subr.mxu0 0.0
    %1179 = vmatpush1.msra.mxu0 0.0
    %1180 = vmatprep.subr.mxu0 0.0
    %1181 = vmatpush1.msra.mxu0 0.0
    %1182 = vmatprep.subr.mxu0 0.0
    %1183 = vmatpush1.msra.mxu0 0.0
    %1184 = vmatprep.subr.mxu0 0.0
    %1185 = vmatpush1.msra.mxu0 0.0
    %1186 = vmatprep.subr.mxu0 0.0
    %1187 = vmatpush1.msra.mxu0 0.0
    %1188 = vmatprep.mubr.f32.mxu0 0.0
    %1189 = vmatmul.mubr.f32.gmra.mrb[0].mxu0 %v1051
    %v1190 = vpop.f32.mrb[0].mxu0
    %v1191 = vadd.f32 0.0, %v1190
    %v1192 = vpop.f32.mrb[0].mxu0
    %v1193 = vadd.f32 0.0, %v1192
    %1194 = vdwg.mxu0
    %v1199 = vrot.slane %v1120, 3
    %v1200 = vrot.slane %v1122, 3
    %v1201 = vrot.slane %v1191, 3
    %v1202 = vrot.slane %v1193, 3
    %v1207 = vadd.f32 %v210, %v1199
    %v1208 = vadd.f32 %v212, %v1200
    %v1209 = vadd.f32 %v281, %v1201
    %v1210 = vadd.f32 %v283, %v1202
    %v1211 = vxor.u32 %v1207, 2147483648
    %v1212 = vmul.f32 %v1211, 1.442695
    %v1213 = vpow.pop %v1212
    %v1214 = vadd.f32 %v1213, 1.0
    %v1215 = vrcp.pop %v1214
    %v1216 = vmul.f32 1.0, %v1215
    %v1217 = vxor.u32 %v1208, 2147483648
    %v1218 = vmul.f32 %v1217, 1.442695
    %v1219 = vpow.pop %v1218
    %v1220 = vadd.f32 %v1219, 1.0
    %v1221 = vrcp.pop %v1220
    %v1222 = vmul.f32 1.0, %v1221
    %v1223 = vtanh.pop %v1209
    %v1224 = vxor.u32 %v1210, 2147483648
    %v1225 = vmul.f32 %v1224, 1.442695
    %v1226 = vpow.pop %v1225
    %v1227 = vadd.f32 %v1226, 1.0
    %v1228 = vrcp.pop %v1227
    %v1229 = vmul.f32 1.0, %v1228
    %v1231 = vrot.slane %v1047, 7
    %v1233 = vmul.f32 %v1222, %v1231
    %v1234 = vmul.f32 %v1216, %v1223
    %v1235 = vadd.f32 %v1233, %v1234
    %v1236 = vtanh.pop %v1235
    %v1237 = vmul.f32 %v1229, %v1236
    %v1239 = vrot.slane %v1237, 5
    %1241 = vmatprep.subr.mxu0 %v45
    %1242 = vmatpush1.msra.mxu0 %v44
    %1243 = vmatprep.subr.mxu0 %v49
    %1244 = vmatpush1.msra.mxu0 %v48
    %1245 = vmatprep.subr.mxu0 %v53
    %1246 = vmatpush1.msra.mxu0 %v52
    %1247 = vmatprep.subr.mxu0 %v57
    %1248 = vmatpush1.msra.mxu0 %v56
    %1249 = vmatprep.subr.mxu0 %v61
    %1250 = vmatpush1.msra.mxu0 %v60
    %1251 = vmatprep.subr.mxu0 %v65
    %1252 = vmatpush1.msra.mxu0 %v64
    %1253 = vmatprep.subr.mxu0 %v69
    %1254 = vmatpush1.msra.mxu0 %v68
    %1255 = vmatprep.subr.mxu0 %v73
    %1256 = vmatpush1.msra.mxu0 %v72
    %1257 = vmatprep.subr.mxu0 %v77
    %1258 = vmatpush1.msra.mxu0 %v76
    %1259 = vmatprep.subr.mxu0 %v81
    %1260 = vmatpush1.msra.mxu0 %v80
    %1261 = vmatprep.subr.mxu0 %v85
    %1262 = vmatpush1.msra.mxu0 %v84
    %1263 = vmatprep.subr.mxu0 %v89
    %1264 = vmatpush1.msra.mxu0 %v88
    %1265 = vmatprep.subr.mxu0 %v93
    %1266 = vmatpush1.msra.mxu0 %v92
    %1267 = vmatprep.subr.mxu0 %v97
    %1268 = vmatpush1.msra.mxu0 %v96
    %1269 = vmatprep.subr.mxu0 %v101
    %1270 = vmatpush1.msra.mxu0 %v100
    %1271 = vmatprep.subr.mxu0 %v105
    %1272 = vmatpush1.msra.mxu0 %v104
    %1273 = vmatprep.subr.mxu0 0.0
    %1274 = vmatpush1.msra.mxu0 0.0
    %1275 = vmatprep.subr.mxu0 0.0
    %1276 = vmatpush1.msra.mxu0 0.0
    %1277 = vmatprep.subr.mxu0 0.0
    %1278 = vmatpush1.msra.mxu0 0.0
    %1279 = vmatprep.subr.mxu0 0.0
    %1280 = vmatpush1.msra.mxu0 0.0
    %1281 = vmatprep.subr.mxu0 0.0
    %1282 = vmatpush1.msra.mxu0 0.0
    %1283 = vmatprep.subr.mxu0 0.0
    %1284 = vmatpush1.msra.mxu0 0.0
    %1285 = vmatprep.subr.mxu0 0.0
    %1286 = vmatpush1.msra.mxu0 0.0
    %1287 = vmatprep.subr.mxu0 0.0
    %1288 = vmatpush1.msra.mxu0 0.0
    %1289 = vmatprep.subr.mxu0 0.0
    %1290 = vmatpush1.msra.mxu0 0.0
    %1291 = vmatprep.subr.mxu0 0.0
    %1292 = vmatpush1.msra.mxu0 0.0
    %1293 = vmatprep.subr.mxu0 0.0
    %1294 = vmatpush1.msra.mxu0 0.0
    %1295 = vmatprep.subr.mxu0 0.0
    %1296 = vmatpush1.msra.mxu0 0.0
    %1297 = vmatprep.subr.mxu0 0.0
    %1298 = vmatpush1.msra.mxu0 0.0
    %1299 = vmatprep.subr.mxu0 0.0
    %1300 = vmatpush1.msra.mxu0 0.0
    %1301 = vmatprep.subr.mxu0 0.0
    %1302 = vmatpush1.msra.mxu0 0.0
    %1303 = vmatprep.subr.mxu0 0.0
    %1304 = vmatpush1.msra.mxu0 0.0
    %1305 = vmatprep.mubr.f32.mxu0 0.0
    %1306 = vmatmul.mubr.f32.gmra.mrb[0].mxu0 %v1239
    %v1307 = vpop.f32.mrb[0].mxu0
    %v1308 = vadd.f32 0.0, %v1307
    %v1309 = vpop.f32.mrb[0].mxu0
    %v1310 = vadd.f32 0.0, %v1309
    %1311 = vdwg.mxu0
    %1312 = vmatprep.subr.mxu0 %v47
    %1313 = vmatpush1.msra.mxu0 %v46
    %1314 = vmatprep.subr.mxu0 %v51
    %1315 = vmatpush1.msra.mxu0 %v50
    %1316 = vmatprep.subr.mxu0 %v55
    %1317 = vmatpush1.msra.mxu0 %v54
    %1318 = vmatprep.subr.mxu0 %v59
    %1319 = vmatpush1.msra.mxu0 %v58
    %1320 = vmatprep.subr.mxu0 %v63
    %1321 = vmatpush1.msra.mxu0 %v62
    %1322 = vmatprep.subr.mxu0 %v67
    %1323 = vmatpush1.msra.mxu0 %v66
    %1324 = vmatprep.subr.mxu0 %v71
    %1325 = vmatpush1.msra.mxu0 %v70
    %1326 = vmatprep.subr.mxu0 %v75
    %1327 = vmatpush1.msra.mxu0 %v74
    %1328 = vmatprep.subr.mxu0 %v79
    %1329 = vmatpush1.msra.mxu0 %v78
    %1330 = vmatprep.subr.mxu0 %v83
    %1331 = vmatpush1.msra.mxu0 %v82
    %1332 = vmatprep.subr.mxu0 %v87
    %1333 = vmatpush1.msra.mxu0 %v86
    %1334 = vmatprep.subr.mxu0 %v91
    %1335 = vmatpush1.msra.mxu0 %v90
    %1336 = vmatprep.subr.mxu0 %v95
    %1337 = vmatpush1.msra.mxu0 %v94
    %1338 = vmatprep.subr.mxu0 %v99
    %1339 = vmatpush1.msra.mxu0 %v98
    %1340 = vmatprep.subr.mxu0 %v103
    %1341 = vmatpush1.msra.mxu0 %v102
    %1342 = vmatprep.subr.mxu0 %v107
    %1343 = vmatpush1.msra.mxu0 %v106
    %1344 = vmatprep.subr.mxu0 0.0
    %1345 = vmatpush1.msra.mxu0 0.0
    %1346 = vmatprep.subr.mxu0 0.0
    %1347 = vmatpush1.msra.mxu0 0.0
    %1348 = vmatprep.subr.mxu0 0.0
    %1349 = vmatpush1.msra.mxu0 0.0
    %1350 = vmatprep.subr.mxu0 0.0
    %1351 = vmatpush1.msra.mxu0 0.0
    %1352 = vmatprep.subr.mxu0 0.0
    %1353 = vmatpush1.msra.mxu0 0.0
    %1354 = vmatprep.subr.mxu0 0.0
    %1355 = vmatpush1.msra.mxu0 0.0
    %1356 = vmatprep.subr.mxu0 0.0
    %1357 = vmatpush1.msra.mxu0 0.0
    %1358 = vmatprep.subr.mxu0 0.0
    %1359 = vmatpush1.msra.mxu0 0.0
    %1360 = vmatprep.subr.mxu0 0.0
    %1361 = vmatpush1.msra.mxu0 0.0
    %1362 = vmatprep.subr.mxu0 0.0
    %1363 = vmatpush1.msra.mxu0 0.0
    %1364 = vmatprep.subr.mxu0 0.0
    %1365 = vmatpush1.msra.mxu0 0.0
    %1366 = vmatprep.subr.mxu0 0.0
    %1367 = vmatpush1.msra.mxu0 0.0
    %1368 = vmatprep.subr.mxu0 0.0
    %1369 = vmatpush1.msra.mxu0 0.0
    %1370 = vmatprep.subr.mxu0 0.0
    %1371 = vmatpush1.msra.mxu0 0.0
    %1372 = vmatprep.subr.mxu0 0.0
    %1373 = vmatpush1.msra.mxu0 0.0
    %1374 = vmatprep.subr.mxu0 0.0
    %1375 = vmatpush1.msra.mxu0 0.0
    %1376 = vmatprep.mubr.f32.mxu0 0.0
    %1377 = vmatmul.mubr.f32.gmra.mrb[0].mxu0 %v1239
    %v1378 = vpop.f32.mrb[0].mxu0
    %v1379 = vadd.f32 0.0, %v1378
    %v1380 = vpop.f32.mrb[0].mxu0
    %v1381 = vadd.f32 0.0, %v1380
    %1382 = vdwg.mxu0
    %v1387 = vrot.slane %v1308, 2
    %v1388 = vrot.slane %v1310, 2
    %v1389 = vrot.slane %v1379, 2
    %v1390 = vrot.slane %v1381, 2
    %v1395 = vadd.f32 %v210, %v1387
    %v1396 = vadd.f32 %v212, %v1388
    %v1397 = vadd.f32 %v281, %v1389
    %v1398 = vadd.f32 %v283, %v1390
    %v1399 = vxor.u32 %v1395, 2147483648
    %v1400 = vmul.f32 %v1399, 1.442695
    %v1401 = vpow.pop %v1400
    %v1402 = vadd.f32 %v1401, 1.0
    %v1403 = vrcp.pop %v1402
    %v1404 = vmul.f32 1.0, %v1403
    %v1405 = vxor.u32 %v1396, 2147483648
    %v1406 = vmul.f32 %v1405, 1.442695
    %v1407 = vpow.pop %v1406
    %v1408 = vadd.f32 %v1407, 1.0
    %v1409 = vrcp.pop %v1408
    %v1410 = vmul.f32 1.0, %v1409
    %v1411 = vtanh.pop %v1397
    %v1412 = vxor.u32 %v1398, 2147483648
    %v1413 = vmul.f32 %v1412, 1.442695
    %v1414 = vpow.pop %v1413
    %v1415 = vadd.f32 %v1414, 1.0
    %v1416 = vrcp.pop %v1415
    %v1417 = vmul.f32 1.0, %v1416
    %v1419 = vrot.slane %v1235, 7
    %v1421 = vmul.f32 %v1410, %v1419
    %v1422 = vmul.f32 %v1404, %v1411
    %v1423 = vadd.f32 %v1421, %v1422
    %v1424 = vtanh.pop %v1423
    %v1425 = vmul.f32 %v1417, %v1424
    %v1427 = vrot.slane %v1425, 6
    %1429 = vmatprep.subr.mxu0 %v45
    %1430 = vmatpush1.msra.mxu0 %v44
    %1431 = vmatprep.subr.mxu0 %v49
    %1432 = vmatpush1.msra.mxu0 %v48
    %1433 = vmatprep.subr.mxu0 %v53
    %1434 = vmatpush1.msra.mxu0 %v52
    %1435 = vmatprep.subr.mxu0 %v57
    %1436 = vmatpush1.msra.mxu0 %v56
    %1437 = vmatprep.subr.mxu0 %v61
    %1438 = vmatpush1.msra.mxu0 %v60
    %1439 = vmatprep.subr.mxu0 %v65
    %1440 = vmatpush1.msra.mxu0 %v64
    %1441 = vmatprep.subr.mxu0 %v69
    %1442 = vmatpush1.msra.mxu0 %v68
    %1443 = vmatprep.subr.mxu0 %v73
    %1444 = vmatpush1.msra.mxu0 %v72
    %1445 = vmatprep.subr.mxu0 %v77
    %1446 = vmatpush1.msra.mxu0 %v76
    %1447 = vmatprep.subr.mxu0 %v81
    %1448 = vmatpush1.msra.mxu0 %v80
    %1449 = vmatprep.subr.mxu0 %v85
    %1450 = vmatpush1.msra.mxu0 %v84
    %1451 = vmatprep.subr.mxu0 %v89
    %1452 = vmatpush1.msra.mxu0 %v88
    %1453 = vmatprep.subr.mxu0 %v93
    %1454 = vmatpush1.msra.mxu0 %v92
    %1455 = vmatprep.subr.mxu0 %v97
    %1456 = vmatpush1.msra.mxu0 %v96
    %1457 = vmatprep.subr.mxu0 %v101
    %1458 = vmatpush1.msra.mxu0 %v100
    %1459 = vmatprep.subr.mxu0 %v105
    %1460 = vmatpush1.msra.mxu0 %v104
    %1461 = vmatprep.subr.mxu0 0.0
    %1462 = vmatpush1.msra.mxu0 0.0
    %1463 = vmatprep.subr.mxu0 0.0
    %1464 = vmatpush1.msra.mxu0 0.0
    %1465 = vmatprep.subr.mxu0 0.0
    %1466 = vmatpush1.msra.mxu0 0.0
    %1467 = vmatprep.subr.mxu0 0.0
    %1468 = vmatpush1.msra.mxu0 0.0
    %1469 = vmatprep.subr.mxu0 0.0
    %1470 = vmatpush1.msra.mxu0 0.0
    %1471 = vmatprep.subr.mxu0 0.0
    %1472 = vmatpush1.msra.mxu0 0.0
    %1473 = vmatprep.subr.mxu0 0.0
    %1474 = vmatpush1.msra.mxu0 0.0
    %1475 = vmatprep.subr.mxu0 0.0
    %1476 = vmatpush1.msra.mxu0 0.0
    %1477 = vmatprep.subr.mxu0 0.0
    %1478 = vmatpush1.msra.mxu0 0.0
    %1479 = vmatprep.subr.mxu0 0.0
    %1480 = vmatpush1.msra.mxu0 0.0
    %1481 = vmatprep.subr.mxu0 0.0
    %1482 = vmatpush1.msra.mxu0 0.0
    %1483 = vmatprep.subr.mxu0 0.0
    %1484 = vmatpush1.msra.mxu0 0.0
    %1485 = vmatprep.subr.mxu0 0.0
    %1486 = vmatpush1.msra.mxu0 0.0
    %1487 = vmatprep.subr.mxu0 0.0
    %1488 = vmatpush1.msra.mxu0 0.0
    %1489 = vmatprep.subr.mxu0 0.0
    %1490 = vmatpush1.msra.mxu0 0.0
    %1491 = vmatprep.subr.mxu0 0.0
    %1492 = vmatpush1.msra.mxu0 0.0
    %1493 = vmatprep.mubr.f32.mxu0 0.0
    %1494 = vmatmul.mubr.f32.gmra.mrb[0].mxu0 %v1427
    %v1495 = vpop.f32.mrb[0].mxu0
    %v1496 = vadd.f32 0.0, %v1495
    %v1497 = vpop.f32.mrb[0].mxu0
    %v1498 = vadd.f32 0.0, %v1497
    %1499 = vdwg.mxu0
    %1500 = vmatprep.subr.mxu0 %v47
    %1501 = vmatpush1.msra.mxu0 %v46
    %1502 = vmatprep.subr.mxu0 %v51
    %1503 = vmatpush1.msra.mxu0 %v50
    %1504 = vmatprep.subr.mxu0 %v55
    %1505 = vmatpush1.msra.mxu0 %v54
    %1506 = vmatprep.subr.mxu0 %v59
    %1507 = vmatpush1.msra.mxu0 %v58
    %1508 = vmatprep.subr.mxu0 %v63
    %1509 = vmatpush1.msra.mxu0 %v62
    %1510 = vmatprep.subr.mxu0 %v67
    %1511 = vmatpush1.msra.mxu0 %v66
    %1512 = vmatprep.subr.mxu0 %v71
    %1513 = vmatpush1.msra.mxu0 %v70
    %1514 = vmatprep.subr.mxu0 %v75
    %1515 = vmatpush1.msra.mxu0 %v74
    %1516 = vmatprep.subr.mxu0 %v79
    %1517 = vmatpush1.msra.mxu0 %v78
    %1518 = vmatprep.subr.mxu0 %v83
    %1519 = vmatpush1.msra.mxu0 %v82
    %1520 = vmatprep.subr.mxu0 %v87
    %1521 = vmatpush1.msra.mxu0 %v86
    %1522 = vmatprep.subr.mxu0 %v91
    %1523 = vmatpush1.msra.mxu0 %v90
    %1524 = vmatprep.subr.mxu0 %v95
    %1525 = vmatpush1.msra.mxu0 %v94
    %1526 = vmatprep.subr.mxu0 %v99
    %1527 = vmatpush1.msra.mxu0 %v98
    %1528 = vmatprep.subr.mxu0 %v103
    %1529 = vmatpush1.msra.mxu0 %v102
    %1530 = vmatprep.subr.mxu0 %v107
    %1531 = vmatpush1.msra.mxu0 %v106
    %1532 = vmatprep.subr.mxu0 0.0
    %1533 = vmatpush1.msra.mxu0 0.0
    %1534 = vmatprep.subr.mxu0 0.0
    %1535 = vmatpush1.msra.mxu0 0.0
    %1536 = vmatprep.subr.mxu0 0.0
    %1537 = vmatpush1.msra.mxu0 0.0
    %1538 = vmatprep.subr.mxu0 0.0
    %1539 = vmatpush1.msra.mxu0 0.0
    %1540 = vmatprep.subr.mxu0 0.0
    %1541 = vmatpush1.msra.mxu0 0.0
    %1542 = vmatprep.subr.mxu0 0.0
    %1543 = vmatpush1.msra.mxu0 0.0
    %1544 = vmatprep.subr.mxu0 0.0
    %1545 = vmatpush1.msra.mxu0 0.0
    %1546 = vmatprep.subr.mxu0 0.0
    %1547 = vmatpush1.msra.mxu0 0.0
    %1548 = vmatprep.subr.mxu0 0.0
    %1549 = vmatpush1.msra.mxu0 0.0
    %1550 = vmatprep.subr.mxu0 0.0
    %1551 = vmatpush1.msra.mxu0 0.0
    %1552 = vmatprep.subr.mxu0 0.0
    %1553 = vmatpush1.msra.mxu0 0.0
    %1554 = vmatprep.subr.mxu0 0.0
    %1555 = vmatpush1.msra.mxu0 0.0
    %1556 = vmatprep.subr.mxu0 0.0
    %1557 = vmatpush1.msra.mxu0 0.0
    %1558 = vmatprep.subr.mxu0 0.0
    %1559 = vmatpush1.msra.mxu0 0.0
    %1560 = vmatprep.subr.mxu0 0.0
    %1561 = vmatpush1.msra.mxu0 0.0
    %1562 = vmatprep.subr.mxu0 0.0
    %1563 = vmatpush1.msra.mxu0 0.0
    %1564 = vmatprep.mubr.f32.mxu0 0.0
    %1565 = vmatmul.mubr.f32.gmra.mrb[0].mxu0 %v1427
    %v1566 = vpop.f32.mrb[0].mxu0
    %v1567 = vadd.f32 0.0, %v1566
    %v1568 = vpop.f32.mrb[0].mxu0
    %v1569 = vadd.f32 0.0, %v1568
    %1570 = vdwg.mxu0
    %v1575 = vrot.slane %v1496, 1
    %v1576 = vrot.slane %v1498, 1
    %v1577 = vrot.slane %v1567, 1
    %v1578 = vrot.slane %v1569, 1
    %v1583 = vadd.f32 %v210, %v1575
    %v1584 = vadd.f32 %v212, %v1576
    %v1585 = vadd.f32 %v281, %v1577
    %v1586 = vadd.f32 %v283, %v1578
    %v1587 = vxor.u32 %v1583, 2147483648
    %v1588 = vmul.f32 %v1587, 1.442695
    %v1589 = vpow.pop %v1588
    %v1590 = vadd.f32 %v1589, 1.0
    %v1591 = vrcp.pop %v1590
    %v1592 = vmul.f32 1.0, %v1591
    %v1593 = vxor.u32 %v1584, 2147483648
    %v1594 = vmul.f32 %v1593, 1.442695
    %v1595 = vpow.pop %v1594
    %v1596 = vadd.f32 %v1595, 1.0
    %v1597 = vrcp.pop %v1596
    %v1598 = vmul.f32 1.0, %v1597
    %v1599 = vtanh.pop %v1585
    %v1600 = vxor.u32 %v1586, 2147483648
    %v1601 = vmul.f32 %v1600, 1.442695
    %v1602 = vpow.pop %v1601
    %v1603 = vadd.f32 %v1602, 1.0
    %v1604 = vrcp.pop %v1603
    %v1605 = vmul.f32 1.0, %v1604
    %v1607 = vrot.slane %v1423, 7
    %v1609 = vmul.f32 %v1598, %v1607
    %v1610 = vmul.f32 %v1592, %v1599
    %v1611 = vadd.f32 %v1609, %v1610
    %v1612 = vtanh.pop %v1611
    %v1613 = vmul.f32 %v1605, %v1612
    %v1614 = vld [vmem:[%s5] sm:$0xff]
    %v1615 = vld [vmem:[%s5 + $0x8] sm:$0xff]
    %v1616 = vld [vmem:[%s5 + $0x10] sm:$0xff]
    %v1617 = vld [vmem:[%s5 + $0x18] sm:$0xff]
    %v1618 = vld [vmem:[%s5 + $0x20] sm:$0xff]
    %v1619 = vld [vmem:[%s5 + $0x28] sm:$0xff]
    %v1620 = vld [vmem:[%s5 + $0x30] sm:$0xff]
    %v1621 = vld [vmem:[%s5 + $0x38] sm:$0xff]
    %v1622 = vld [vmem:[%s5 + $0x40] sm:$0xff]
    %v1623 = vld [vmem:[%s5 + $0x48] sm:$0xff]
    %v1624 = vld [vmem:[%s5 + $0x50] sm:$0xff]
    %v1625 = vld [vmem:[%s5 + $0x58] sm:$0xff]
    %v1626 = vld [vmem:[%s5 + $0x60] sm:$0xff]
    %v1627 = vld [vmem:[%s5 + $0x68] sm:$0xff]
    %v1628 = vld [vmem:[%s5 + $0x70] sm:$0xff]
    %v1629 = vld [vmem:[%s5 + $0x78] sm:$0xff]
    %v1630 = vld [vmem:[%s1] sm:$0x1]
    %v1631 = vld [vmem:[%s6] sm:$0xff]
    %v1632 = vld [vmem:[%s6 + $0x8] sm:$0xff]
    %v1634 = vsel %vm139, %v1630, 0
    %1636 = vmatprep.subr.mxu0 0.0
    %1637 = vmatpush1.msra.mxu0 %v1631
    %1638 = vmatprep.subr.mxu0 0.0
    %1639 = vmatpush1.msra.mxu0 %v1632
    %1640 = vmatprep.subr.mxu0 0.0
    %1641 = vmatpush1.msra.mxu0 0.0
    %1642 = vmatprep.subr.mxu0 0.0
    %1643 = vmatpush1.msra.mxu0 0.0
    %1644 = vmatprep.subr.mxu0 0.0
    %1645 = vmatpush1.msra.mxu0 0.0
    %1646 = vmatprep.subr.mxu0 0.0
    %1647 = vmatpush1.msra.mxu0 0.0
    %1648 = vmatprep.subr.mxu0 0.0
    %1649 = vmatpush1.msra.mxu0 0.0
    %1650 = vmatprep.subr.mxu0 0.0
    %1651 = vmatpush1.msra.mxu0 0.0
    %1652 = vmatprep.subr.mxu0 0.0
    %1653 = vmatpush1.msra.mxu0 0.0
    %1654 = vmatprep.subr.mxu0 0.0
    %1655 = vmatpush1.msra.mxu0 0.0
    %1656 = vmatprep.subr.mxu0 0.0
    %1657 = vmatpush1.msra.mxu0 0.0
    %1658 = vmatprep.subr.mxu0 0.0
    %1659 = vmatpush1.msra.mxu0 0.0
    %1660 = vmatprep.subr.mxu0 0.0
    %1661 = vmatpush1.msra.mxu0 0.0
    %1662 = vmatprep.subr.mxu0 0.0
    %1663 = vmatpush1.msra.mxu0 0.0
    %1664 = vmatprep.subr.mxu0 0.0
    %1665 = vmatpush1.msra.mxu0 0.0
    %1666 = vmatprep.subr.mxu0 0.0
    %1667 = vmatpush1.msra.mxu0 0.0
    %1668 = vmatprep.subr.mxu0 0.0
    %1669 = vmatpush1.msra.mxu0 0.0
    %1670 = vmatprep.subr.mxu0 0.0
    %1671 = vmatpush1.msra.mxu0 0.0
    %1672 = vmatprep.subr.mxu0 0.0
    %1673 = vmatpush1.msra.mxu0 0.0
    %1674 = vmatprep.subr.mxu0 0.0
    %1675 = vmatpush1.msra.mxu0 0.0
    %1676 = vmatprep.subr.mxu0 0.0
    %1677 = vmatpush1.msra.mxu0 0.0
    %1678 = vmatprep.subr.mxu0 0.0
    %1679 = vmatpush1.msra.mxu0 0.0
    %1680 = vmatprep.subr.mxu0 0.0
    %1681 = vmatpush1.msra.mxu0 0.0
    %1682 = vmatprep.subr.mxu0 0.0
    %1683 = vmatpush1.msra.mxu0 0.0
    %1684 = vmatprep.subr.mxu0 0.0
    %1685 = vmatpush1.msra.mxu0 0.0
    %1686 = vmatprep.subr.mxu0 0.0
    %1687 = vmatpush1.msra.mxu0 0.0
    %1688 = vmatprep.subr.mxu0 0.0
    %1689 = vmatpush1.msra.mxu0 0.0
    %1690 = vmatprep.subr.mxu0 0.0
    %1691 = vmatpush1.msra.mxu0 0.0
    %1692 = vmatprep.subr.mxu0 0.0
    %1693 = vmatpush1.msra.mxu0 0.0
    %1694 = vmatprep.subr.mxu0 0.0
    %1695 = vmatpush1.msra.mxu0 0.0
    %1696 = vmatprep.subr.mxu0 0.0
    %1697 = vmatpush1.msra.mxu0 0.0
    %1698 = vmatprep.subr.mxu0 0.0
    %1699 = vmatpush1.msra.mxu0 0.0
    %1700 = vmatprep.mubr.f32.mxu0 0.0
    %1701 = vmatmul.mubr.f32.gmra.mrb[0].mxu0 %v1634
    %v1702 = vpop.f32.mrb[0].mxu0
    %v1703 = vadd.f32 0.0, %v1702
    %v1704 = vpop.f32.mrb[0].mxu0
    %1705 = vdwg.mxu0
    %v1707 = vrot.slane %v1613, 7
    %1709 = vmatprep.subr.mxu0 0.0
    %1710 = vmatpush1.msra.mxu0 %v1614
    %1711 = vmatprep.subr.mxu0 0.0
    %1712 = vmatpush1.msra.mxu0 %v1615
    %1713 = vmatprep.subr.mxu0 0.0
    %1714 = vmatpush1.msra.mxu0 %v1616
    %1715 = vmatprep.subr.mxu0 0.0
    %1716 = vmatpush1.msra.mxu0 %v1617
    %1717 = vmatprep.subr.mxu0 0.0
    %1718 = vmatpush1.msra.mxu0 %v1618
    %1719 = vmatprep.subr.mxu0 0.0
    %1720 = vmatpush1.msra.mxu0 %v1619
    %1721 = vmatprep.subr.mxu0 0.0
    %1722 = vmatpush1.msra.mxu0 %v1620
    %1723 = vmatprep.subr.mxu0 0.0
    %1724 = vmatpush1.msra.mxu0 %v1621
    %1725 = vmatprep.subr.mxu0 0.0
    %1726 = vmatpush1.msra.mxu0 %v1622
    %1727 = vmatprep.subr.mxu0 0.0
    %1728 = vmatpush1.msra.mxu0 %v1623
    %1729 = vmatprep.subr.mxu0 0.0
    %1730 = vmatpush1.msra.mxu0 %v1624
    %1731 = vmatprep.subr.mxu0 0.0
    %1732 = vmatpush1.msra.mxu0 %v1625
    %1733 = vmatprep.subr.mxu0 0.0
    %1734 = vmatpush1.msra.mxu0 %v1626
    %1735 = vmatprep.subr.mxu0 0.0
    %1736 = vmatpush1.msra.mxu0 %v1627
    %1737 = vmatprep.subr.mxu0 0.0
    %1738 = vmatpush1.msra.mxu0 %v1628
    %1739 = vmatprep.subr.mxu0 0.0
    %1740 = vmatpush1.msra.mxu0 %v1629
    %1741 = vmatprep.subr.mxu0 0.0
    %1742 = vmatpush1.msra.mxu0 0.0
    %1743 = vmatprep.subr.mxu0 0.0
    %1744 = vmatpush1.msra.mxu0 0.0
    %1745 = vmatprep.subr.mxu0 0.0
    %1746 = vmatpush1.msra.mxu0 0.0
    %1747 = vmatprep.subr.mxu0 0.0
    %1748 = vmatpush1.msra.mxu0 0.0
    %1749 = vmatprep.subr.mxu0 0.0
    %1750 = vmatpush1.msra.mxu0 0.0
    %1751 = vmatprep.subr.mxu0 0.0
    %1752 = vmatpush1.msra.mxu0 0.0
    %1753 = vmatprep.subr.mxu0 0.0
    %1754 = vmatpush1.msra.mxu0 0.0
    %1755 = vmatprep.subr.mxu0 0.0
    %1756 = vmatpush1.msra.mxu0 0.0
    %1757 = vmatprep.subr.mxu0 0.0
    %1758 = vmatpush1.msra.mxu0 0.0
    %1759 = vmatprep.subr.mxu0 0.0
    %1760 = vmatpush1.msra.mxu0 0.0
    %1761 = vmatprep.subr.mxu0 0.0
    %1762 = vmatpush1.msra.mxu0 0.0
    %1763 = vmatprep.subr.mxu0 0.0
    %1764 = vmatpush1.msra.mxu0 0.0
    %1765 = vmatprep.subr.mxu0 0.0
    %1766 = vmatpush1.msra.mxu0 0.0
    %1767 = vmatprep.subr.mxu0 0.0
    %1768 = vmatpush1.msra.mxu0 0.0
    %1769 = vmatprep.subr.mxu0 0.0
    %1770 = vmatpush1.msra.mxu0 0.0
    %1771 = vmatprep.subr.mxu0 0.0
    %1772 = vmatpush1.msra.mxu0 0.0
    %1773 = vmatprep.mubr.f32.mxu0 0.0
    %1774 = vmatmul.mubr.f32.gmra.mrb[0].mxu0 %v1707
    %v1775 = vpop.f32.mrb[0].mxu0
    %v1776 = vadd.f32 %v1703, %v1775
    %v1777 = vpop.f32.mrb[0].mxu0
    %1778 = vdwg.mxu0
    %v1779 = vld [vmem:[%s7] sm:$0x1]
    %v1780 = vadd.f32 %v1776, %v1779
    %vm1781 = vcmask 57344
    %v1782 = vsel %vm1781, %v1780, -inf
    %1783 = vmax.xlane.f32.xlu0 %v1782
    %v1784 = vpop.xlane.xlu0 %1783
    %v1785 = vsub.f32 %v1780, %v1784
    %v1786 = vmul.f32 %v1785, 1.442695
    %v1787 = vpow.pop %v1786
    %v1788 = vsel %vm1781, %v1787, 0.0
    %1789 = vadd.xlane.f32.xlu0 %v1788
    %v1790 = vpop.xlane.xlu0 %1789
    %v1791 = vlog2.pop %v1790
    %v1792 = vmul.f32 %v1791, 0.6931472
    %v1793 = vadd.f32 %v1792, %v1784
    %v1794 = vsub.f32 %v1780, %v1793
    %1795 = vst.msk [vmem:[#allocation5] sm:$0x1] %vm1781, %v1794
    // Predicated region
    $region38: #{tpu_custom_call.1} parent=1 // pred_check
      _
    $region39: #{tpu_custom_call.1} parent=1 // pred_check_branch
      %1797 = sbr.rel (0) target = $region41
    $region40: #{tpu_custom_call.1} parent=1 // pred_region
      %s1799 = ssub.s32 16, 16
      %1800 = vsyncadd [#allocation4], %s1799
      %s1802 = sshll.u32 [#allocation5], 4
      %s1803 = int_to_ptr.vmem [resolvable:$true] %s1802
      %1805 = dma.vmem_to_hbm [thread:$0]  %s1803, 16, %s8, [#allocation4]
    $region41: #{tpu_custom_call.1} parent=1 // pred_fallthru
      _
    // Predicated region
    $region42: #{tpu_custom_call.1} parent=1 // pred_check
      _
    $region43: #{tpu_custom_call.1} parent=1 // pred_check_branch
      %1807 = sbr.rel (0) target = $region45
    $region44: #{tpu_custom_call.1} parent=1 // pred_region
      %1808 = dma.done [#allocation4], 16
    $region45: #{tpu_custom_call.1} parent=1 // pred_fallthru
      _
    %1809 = vsyncpa [#allocation3], 1
    %1810 = vsyncpa [#allocation4], 1

</llo_original>
